<compile_context>
chip_gen: v7x
topology: tpu7x:2x2x1
jax: 0.10.0
libtpu: 0.0.40
codegen_flags: <defaults>
</compile_context>

<pallas_src>
import functools

import jax
import jax.numpy as jnp
from jax.experimental import pallas as pl
from jax.experimental.pallas import tpu as pltpu


def _conv_bn_relu_kernel(x_ref, w_ref, gamma_ref, beta_ref, o_ref, *, eps):
    # x_ref:     (Cin, M)   bf16  -- activations, channels-major (no transpose)
    # w_ref:     (Cout, Cin) bf16 -- 1x1 conv weight, natural PyTorch OI layout
    # gamma_ref: (Cout, 1)  f32
    # beta_ref:  (Cout, 1)  f32
    # o_ref:     (Cout, M)  f32
    #
    # 1x1 convolution == channel matmul (MXU, bf16 operands, f32 accumulate).
    y = jnp.dot(w_ref[...], x_ref[...],
                preferred_element_type=jnp.float32)          # (Cout, M)

    # BatchNorm2d training-mode stats: per-channel mean / biased variance over
    # all N*H*W positions (two-pass form is numerically safer than E[y^2]-m^2).
    mean = jnp.mean(y, axis=1, keepdims=True)                # (Cout, 1)
    centered = y - mean
    var = jnp.mean(centered * centered, axis=1, keepdims=True)
    inv_std = jax.lax.rsqrt(var + eps)                       # (Cout, 1)

    # Fused affine + ReLU epilogue: single FMA + max over the (Cout, M) tile.
    s = gamma_ref[...] * inv_std                             # (Cout, 1)
    b = beta_ref[...] - mean * s                             # (Cout, 1)
    o_ref[...] = jnp.maximum(y * s + b, 0.0)


def conv_bn_relu(x_nchw, weight_oihw, gamma, beta, eps=1e-5):
    """x_nchw: (N, Cin, H, W); weight_oihw: (Cout, Cin, 1, 1). Returns NCHW."""
    n, cin, h, w = x_nchw.shape
    cout = weight_oihw.shape[0]
    m = n * h * w

    # Channels-major flatten.  For N == 1 the moveaxis is a degenerate-axis
    # move, so XLA emits no transpose copy: this is a pure reshape.
    x_cm = jnp.moveaxis(x_nchw.reshape(n, cin, h * w), 0, 1).reshape(cin, m)
    w_mat = weight_oihw.reshape(cout, cin)
    gamma2d = gamma.reshape(cout, 1).astype(jnp.float32)
    beta2d = beta.reshape(cout, 1).astype(jnp.float32)

    kernel = functools.partial(_conv_bn_relu_kernel, eps=float(eps))

    out_cm = pl.pallas_call(
        kernel,
        out_shape=jax.ShapeDtypeStruct((cout, m), jnp.float32),
        in_specs=[
            pl.BlockSpec(memory_space=pltpu.MemorySpace.VMEM),  # x  (bf16)
            pl.BlockSpec(memory_space=pltpu.MemorySpace.VMEM),  # w  (bf16)
            pl.BlockSpec(memory_space=pltpu.MemorySpace.VMEM),  # gamma
            pl.BlockSpec(memory_space=pltpu.MemorySpace.VMEM),  # beta
        ],
        out_specs=pl.BlockSpec(memory_space=pltpu.MemorySpace.VMEM),
    )(x_cm.astype(jnp.bfloat16), w_mat.astype(jnp.bfloat16), gamma2d, beta2d)

    # (Cout, N*H*W) -> (N, Cout, H, W); again free (no copy) for N == 1.
    return jnp.moveaxis(out_cm.reshape(cout, n, h * w), 0, 1).reshape(
        n, cout, h, w)


if __name__ == "__main__":
    key = jax.random.PRNGKey(0)
    k_x, k_w = jax.random.split(key)

    # Shapes implied by the module: input (1, 1280, 7, 7), conv 1280 -> 128.
    N, CIN, H, W = 1, 1280, 7, 7
    COUT = 128

    x = jax.random.normal(k_x, (N, CIN, H, W), dtype=jnp.float32)
    # Deterministic synthetic conv weight (PyTorch OIHW layout, 1x1 kernel).
    bound = 1.0 / (CIN ** 0.5)
    weight = jax.random.uniform(k_w, (COUT, CIN, 1, 1), dtype=jnp.float32,
                                minval=-bound, maxval=bound)
    gamma = jnp.ones((COUT,), dtype=jnp.float32)   # BN weight init
    beta = jnp.zeros((COUT,), dtype=jnp.float32)   # BN bias init

    out = conv_bn_relu(x, weight, gamma, beta, eps=1e-5)
    out = jax.block_until_ready(out)

    # Sanity check against a plain-JAX reference of the same math with the
    # same bf16 operand rounding (accumulation stays f32), so only summation
    # order differs from the MXU result.
    x_flat = jnp.transpose(x, (0, 2, 3, 1)).reshape(N * H * W, CIN)
    x_b = x_flat.astype(jnp.bfloat16).astype(jnp.float32)
    w_b = weight.reshape(COUT, CIN).astype(jnp.bfloat16).astype(jnp.float32)
    y_ref = x_b @ w_b.T
    mean = y_ref.mean(axis=0, keepdims=True)
    var = ((y_ref - mean) ** 2).mean(axis=0, keepdims=True)
    ref = jnp.maximum((y_ref - mean) / jnp.sqrt(var + 1e-5) * gamma + beta, 0.0)
    ref = jnp.transpose(ref.reshape(N, H, W, COUT), (0, 3, 1, 2))
    assert out.shape == (N, COUT, H, W)
    assert jnp.allclose(out, ref, atol=1e-2, rtol=1e-2), \
        float(jnp.max(jnp.abs(out - ref)))

    print("KERNEL_OK")
</pallas_src>

<mosaic_0001>
module attributes {stable_mosaic.version = 11 : i64} {
  func.func @_conv_bn_relu_kernel(%arg0: memref<1280x49xbf16, #tpu.memory_space<vmem>>, %arg1: memref<128x1280xbf16, #tpu.memory_space<vmem>>, %arg2: memref<128x1xf32, #tpu.memory_space<vmem>>, %arg3: memref<128x1xf32, #tpu.memory_space<vmem>>, %arg4: memref<128x49xf32, #tpu.memory_space<vmem>>) attributes {dimension_semantics = [], scalar_prefetch = 0 : i64, scratch_operands = 0 : i64, tpu.core_type = #tpu.core_type<tc>} {
    %c0 = arith.constant 0 : index
    %c0_0 = arith.constant 0 : index
    %0 = vector.load %arg1[%c0, %c0_0] : memref<128x1280xbf16, #tpu.memory_space<vmem>>, vector<128x1280xbf16>
    %c0_1 = arith.constant 0 : index
    %c0_2 = arith.constant 0 : index
    %1 = vector.load %arg0[%c0_1, %c0_2] : memref<1280x49xbf16, #tpu.memory_space<vmem>>, vector<1280x49xbf16>
    %cst = arith.constant dense<0.000000e+00> : vector<128x49xf32>
    %2 = tpu.matmul %0, %1, %cst {dimension_numbers = #tpu.dot_dimension_numbers<[1], [0], [0], [1], [0, 0, 1, 1], [], []>} : vector<128x1280xbf16>, vector<1280x49xbf16>, vector<128x49xf32> -> vector<128x49xf32>
    %cst_3 = arith.constant dense<0.000000e+00> : vector<128xf32>
    %3 = vector.multi_reduction <add>, %2, %cst_3 [1] : vector<128x49xf32> to vector<128xf32>
    %4 = vector.shape_cast %3 : vector<128xf32> to vector<128x1xf32>
    %cst_4 = arith.constant 4.900000e+01 : f32
    %5 = vector.broadcast %cst_4 : f32 to vector<128x1xf32>
    %6 = arith.divf %4, %5 : vector<128x1xf32>
    %7 = vector.broadcast %6 : vector<128x1xf32> to vector<128x49xf32>
    %8 = arith.subf %2, %7 : vector<128x49xf32>
    %9 = arith.mulf %8, %8 : vector<128x49xf32>
    %cst_5 = arith.constant dense<0.000000e+00> : vector<128xf32>
    %10 = vector.multi_reduction <add>, %9, %cst_5 [1] : vector<128x49xf32> to vector<128xf32>
    %11 = vector.shape_cast %10 : vector<128xf32> to vector<128x1xf32>
    %cst_6 = arith.constant 4.900000e+01 : f32
    %12 = vector.broadcast %cst_6 : f32 to vector<128x1xf32>
    %13 = arith.divf %11, %12 : vector<128x1xf32>
    %cst_7 = arith.constant 9.99999974E-6 : f32
    %14 = vector.broadcast %cst_7 : f32 to vector<128x1xf32>
    %15 = arith.addf %13, %14 : vector<128x1xf32>
    %16 = math.rsqrt %15 : vector<128x1xf32>
    %c0_8 = arith.constant 0 : index
    %c0_9 = arith.constant 0 : index
    %17 = vector.load %arg2[%c0_8, %c0_9] : memref<128x1xf32, #tpu.memory_space<vmem>>, vector<128x1xf32>
    %18 = arith.mulf %17, %16 : vector<128x1xf32>
    %c0_10 = arith.constant 0 : index
    %c0_11 = arith.constant 0 : index
    %19 = vector.load %arg3[%c0_10, %c0_11] : memref<128x1xf32, #tpu.memory_space<vmem>>, vector<128x1xf32>
    %20 = arith.mulf %6, %18 : vector<128x1xf32>
    %21 = arith.subf %19, %20 : vector<128x1xf32>
    %22 = vector.broadcast %18 : vector<128x1xf32> to vector<128x49xf32>
    %23 = arith.mulf %2, %22 : vector<128x49xf32>
    %24 = vector.broadcast %21 : vector<128x1xf32> to vector<128x49xf32>
    %25 = arith.addf %23, %24 : vector<128x49xf32>
    %cst_12 = arith.constant 0.000000e+00 : f32
    %26 = vector.broadcast %cst_12 : f32 to vector<128x49xf32>
    %27 = arith.maximumf %25, %26 : vector<128x49xf32>
    %c0_13 = arith.constant 0 : index
    %c0_14 = arith.constant 0 : index
    %28 = vector.load %arg4[%c0_13, %c0_14] : memref<128x49xf32, #tpu.memory_space<vmem>>, vector<128x49xf32>
    tpu.vector_store %arg4[%c0_13, %c0_14], %27 {strides = array<i32>} : memref<128x49xf32, #tpu.memory_space<vmem>>, vector<128x49xf32>,
    return
  }
}

</mosaic_0001>

<llo_original>
// kernel: tpu_custom_call.1
$region0: #{tpu_custom_call.1}
  #allocation0 [shape = 'u32[]', space=smem, size = 0x4, offset = 0x4, fixed_abs, tag = 'smem constant byte address 0x4 - core index']
  #allocation1 [shape = 'u32[144,128]{1,0:T(1,128)}', space=vmem, size = 0x12000, scoped, tag = 'internal scratch']
  %s0 = inlined_call_operand.vmem [shape: bf16[1280,49], index: 0, kind: input, shape index: {}]
  %s1 = inlined_call_operand.vmem [shape: bf16[128,1280], index: 1, kind: input, shape index: {}]
  %s2 = inlined_call_operand.vmem [shape: f32[128,1], index: 2, kind: input, shape index: {}]
  %s3 = inlined_call_operand.vmem [shape: f32[128,1], index: 3, kind: input, shape index: {}]
  %s4 = inlined_call_operand.vmem [shape: f32[128,49], index: 4, kind: output, shape index: {}]
  %s5 = sld [smem:[#allocation0]]
  $region26: #{tpu_custom_call.1} parent=0
    _
  %s7 = ssub.s32 1, %s5
  %s8 = scalar_select 0, %s7, %s5
  // Predicated region
  $region2: #{tpu_custom_call.1} parent=0 // pred_check
    _
  $region3: #{tpu_custom_call.1} parent=0 // pred_check_branch
    %10 = sbr.rel (0) target = $region5
  $region4: #{tpu_custom_call.1} parent=0 // pred_region
    _
  $region5: #{tpu_custom_call.1} parent=0 // pred_fallthru
    _
  // Predicated region
  $region6: #{tpu_custom_call.1} parent=0 // pred_check
    _
  $region7: #{tpu_custom_call.1} parent=0 // pred_check_branch
    %12 = sbr.rel (0) target = $region9
  $region8: #{tpu_custom_call.1} parent=0 // pred_region
    _
  $region9: #{tpu_custom_call.1} parent=0 // pred_fallthru
    _
  // Predicated region
  $region10: #{tpu_custom_call.1} parent=0 // pred_check
    _
  $region11: #{tpu_custom_call.1} parent=0 // pred_check_branch
    %14 = sbr.rel (0) target = $region13
  $region12: #{tpu_custom_call.1} parent=0 // pred_region
    _
  $region13: #{tpu_custom_call.1} parent=0 // pred_fallthru
    _
  // Predicated region
  $region14: #{tpu_custom_call.1} parent=0 // pred_check
    _
  $region15: #{tpu_custom_call.1} parent=0 // pred_check_branch
    %16 = sbr.rel (0) target = $region17
  $region16: #{tpu_custom_call.1} parent=0 // pred_region
    _
  $region17: #{tpu_custom_call.1} parent=0 // pred_fallthru
    _
  %v18 = vld [vmem:[%s1] sm:$0xff]
  %v19 = vld [vmem:[%s1 + $0x8] sm:$0xff]
  %v20 = vld [vmem:[%s1 + $0x10] sm:$0xff]
  %v21 = vld [vmem:[%s1 + $0x18] sm:$0xff]
  %v22 = vld [vmem:[%s1 + $0x20] sm:$0xff]
  %v23 = vld [vmem:[%s1 + $0x28] sm:$0xff]
  %v24 = vld [vmem:[%s1 + $0x30] sm:$0xff]
  %v25 = vld [vmem:[%s1 + $0x38] sm:$0xff]
  %v26 = vld [vmem:[%s1 + $0x40] sm:$0xff]
  %v27 = vld [vmem:[%s1 + $0x48] sm:$0xff]
  %v28 = vld [vmem:[%s1 + $0x50] sm:$0xff]
  %v29 = vld [vmem:[%s1 + $0x58] sm:$0xff]
  %v30 = vld [vmem:[%s1 + $0x60] sm:$0xff]
  %v31 = vld [vmem:[%s1 + $0x68] sm:$0xff]
  %v32 = vld [vmem:[%s1 + $0x70] sm:$0xff]
  %v33 = vld [vmem:[%s1 + $0x78] sm:$0xff]
  %v34 = vld [vmem:[%s1 + $0x80] sm:$0xff]
  %v35 = vld [vmem:[%s1 + $0x88] sm:$0xff]
  %v36 = vld [vmem:[%s1 + $0x90] sm:$0xff]
  %v37 = vld [vmem:[%s1 + $0x98] sm:$0xff]
  %v38 = vld [vmem:[%s1 + $0xa0] sm:$0xff]
  %v39 = vld [vmem:[%s1 + $0xa8] sm:$0xff]
  %v40 = vld [vmem:[%s1 + $0xb0] sm:$0xff]
  %v41 = vld [vmem:[%s1 + $0xb8] sm:$0xff]
  %v42 = vld [vmem:[%s1 + $0xc0] sm:$0xff]
  %v43 = vld [vmem:[%s1 + $0xc8] sm:$0xff]
  %v44 = vld [vmem:[%s1 + $0xd0] sm:$0xff]
  %v45 = vld [vmem:[%s1 + $0xd8] sm:$0xff]
  %v46 = vld [vmem:[%s1 + $0xe0] sm:$0xff]
  %v47 = vld [vmem:[%s1 + $0xe8] sm:$0xff]
  %v48 = vld [vmem:[%s1 + $0xf0] sm:$0xff]
  %v49 = vld [vmem:[%s1 + $0xf8] sm:$0xff]
  %v50 = vld [vmem:[%s1 + $0x100] sm:$0xff]
  %v51 = vld [vmem:[%s1 + $0x108] sm:$0xff]
  %v52 = vld [vmem:[%s1 + $0x110] sm:$0xff]
  %v53 = vld [vmem:[%s1 + $0x118] sm:$0xff]
  %v54 = vld [vmem:[%s1 + $0x120] sm:$0xff]
  %v55 = vld [vmem:[%s1 + $0x128] sm:$0xff]
  %v56 = vld [vmem:[%s1 + $0x130] sm:$0xff]
  %v57 = vld [vmem:[%s1 + $0x138] sm:$0xff]
  %v58 = vld [vmem:[%s1 + $0x140] sm:$0xff]
  %v59 = vld [vmem:[%s1 + $0x148] sm:$0xff]
  %v60 = vld [vmem:[%s1 + $0x150] sm:$0xff]
  %v61 = vld [vmem:[%s1 + $0x158] sm:$0xff]
  %v62 = vld [vmem:[%s1 + $0x160] sm:$0xff]
  %v63 = vld [vmem:[%s1 + $0x168] sm:$0xff]
  %v64 = vld [vmem:[%s1 + $0x170] sm:$0xff]
  %v65 = vld [vmem:[%s1 + $0x178] sm:$0xff]
  %v66 = vld [vmem:[%s1 + $0x180] sm:$0xff]
  %v67 = vld [vmem:[%s1 + $0x188] sm:$0xff]
  %v68 = vld [vmem:[%s1 + $0x190] sm:$0xff]
  %v69 = vld [vmem:[%s1 + $0x198] sm:$0xff]
  %v70 = vld [vmem:[%s1 + $0x1a0] sm:$0xff]
  %v71 = vld [vmem:[%s1 + $0x1a8] sm:$0xff]
  %v72 = vld [vmem:[%s1 + $0x1b0] sm:$0xff]
  %v73 = vld [vmem:[%s1 + $0x1b8] sm:$0xff]
  %v74 = vld [vmem:[%s1 + $0x1c0] sm:$0xff]
  %v75 = vld [vmem:[%s1 + $0x1c8] sm:$0xff]
  %v76 = vld [vmem:[%s1 + $0x1d0] sm:$0xff]
  %v77 = vld [vmem:[%s1 + $0x1d8] sm:$0xff]
  %v78 = vld [vmem:[%s1 + $0x1e0] sm:$0xff]
  %v79 = vld [vmem:[%s1 + $0x1e8] sm:$0xff]
  %v80 = vld [vmem:[%s1 + $0x1f0] sm:$0xff]
  %v81 = vld [vmem:[%s1 + $0x1f8] sm:$0xff]
  %v82 = vld [vmem:[%s1 + $0x200] sm:$0xff]
  %v83 = vld [vmem:[%s1 + $0x208] sm:$0xff]
  %v84 = vld [vmem:[%s1 + $0x210] sm:$0xff]
  %v85 = vld [vmem:[%s1 + $0x218] sm:$0xff]
  %v86 = vld [vmem:[%s1 + $0x220] sm:$0xff]
  %v87 = vld [vmem:[%s1 + $0x228] sm:$0xff]
  %v88 = vld [vmem:[%s1 + $0x230] sm:$0xff]
  %v89 = vld [vmem:[%s1 + $0x238] sm:$0xff]
  %v90 = vld [vmem:[%s1 + $0x240] sm:$0xff]
  %v91 = vld [vmem:[%s1 + $0x248] sm:$0xff]
  %v92 = vld [vmem:[%s1 + $0x250] sm:$0xff]
  %v93 = vld [vmem:[%s1 + $0x258] sm:$0xff]
  %v94 = vld [vmem:[%s1 + $0x260] sm:$0xff]
  %v95 = vld [vmem:[%s1 + $0x268] sm:$0xff]
  %v96 = vld [vmem:[%s1 + $0x270] sm:$0xff]
  %v97 = vld [vmem:[%s1 + $0x278] sm:$0xff]
  %v98 = vld [vmem:[%s0] sm:$0xf]
  %v99 = vld [vmem:[%s0 + $0x4] sm:$0xf]
  %v100 = vld [vmem:[%s0 + $0x8] sm:$0xf]
  %v101 = vld [vmem:[%s0 + $0xc] sm:$0xf]
  %v102 = vld [vmem:[%s0 + $0x10] sm:$0xf]
  %v103 = vld [vmem:[%s0 + $0x14] sm:$0xf]
  %v104 = vld [vmem:[%s0 + $0x18] sm:$0xf]
  %v105 = vld [vmem:[%s0 + $0x1c] sm:$0xf]
  %v106 = vld [vmem:[%s0 + $0x20] sm:$0xf]
  %v107 = vld [vmem:[%s0 + $0x24] sm:$0xf]
  %v108 = vld [vmem:[%s0 + $0x28] sm:$0xf]
  %v109 = vld [vmem:[%s0 + $0x2c] sm:$0xf]
  %v110 = vld [vmem:[%s0 + $0x30] sm:$0xf]
  %v111 = vld [vmem:[%s0 + $0x34] sm:$0xf]
  %v112 = vld [vmem:[%s0 + $0x38] sm:$0xf]
  %v113 = vld [vmem:[%s0 + $0x3c] sm:$0xf]
  %v114 = vld [vmem:[%s0 + $0x40] sm:$0xf]
  %v115 = vld [vmem:[%s0 + $0x44] sm:$0xf]
  %v116 = vld [vmem:[%s0 + $0x48] sm:$0xf]
  %v117 = vld [vmem:[%s0 + $0x4c] sm:$0xf]
  %v118 = vld [vmem:[%s0 + $0x50] sm:$0xf]
  %v119 = vld [vmem:[%s0 + $0x54] sm:$0xf]
  %v120 = vld [vmem:[%s0 + $0x58] sm:$0xf]
  %v121 = vld [vmem:[%s0 + $0x5c] sm:$0xf]
  %v122 = vld [vmem:[%s0 + $0x60] sm:$0xf]
  %v123 = vld [vmem:[%s0 + $0x64] sm:$0xf]
  %v124 = vld [vmem:[%s0 + $0x68] sm:$0xf]
  %v125 = vld [vmem:[%s0 + $0x6c] sm:$0xf]
  %v126 = vld [vmem:[%s0 + $0x70] sm:$0xf]
  %v127 = vld [vmem:[%s0 + $0x74] sm:$0xf]
  %v128 = vld [vmem:[%s0 + $0x78] sm:$0xf]
  %v129 = vld [vmem:[%s0 + $0x7c] sm:$0xf]
  %v130 = vld [vmem:[%s0 + $0x80] sm:$0xf]
  %v131 = vld [vmem:[%s0 + $0x84] sm:$0xf]
  %v132 = vld [vmem:[%s0 + $0x88] sm:$0xf]
  %v133 = vld [vmem:[%s0 + $0x8c] sm:$0xf]
  %v134 = vld [vmem:[%s0 + $0x90] sm:$0xf]
  %v135 = vld [vmem:[%s0 + $0x94] sm:$0xf]
  %v136 = vld [vmem:[%s0 + $0x98] sm:$0xf]
  %v137 = vld [vmem:[%s0 + $0x9c] sm:$0xf]
  %v138 = vld [vmem:[%s0 + $0xa0] sm:$0xf]
  %v139 = vld [vmem:[%s0 + $0xa4] sm:$0xf]
  %v140 = vld [vmem:[%s0 + $0xa8] sm:$0xf]
  %v141 = vld [vmem:[%s0 + $0xac] sm:$0xf]
  %v142 = vld [vmem:[%s0 + $0xb0] sm:$0xf]
  %v143 = vld [vmem:[%s0 + $0xb4] sm:$0xf]
  %v144 = vld [vmem:[%s0 + $0xb8] sm:$0xf]
  %v145 = vld [vmem:[%s0 + $0xbc] sm:$0xf]
  %v146 = vld [vmem:[%s0 + $0xc0] sm:$0xf]
  %v147 = vld [vmem:[%s0 + $0xc4] sm:$0xf]
  %v148 = vld [vmem:[%s0 + $0xc8] sm:$0xf]
  %v149 = vld [vmem:[%s0 + $0xcc] sm:$0xf]
  %v150 = vld [vmem:[%s0 + $0xd0] sm:$0xf]
  %v151 = vld [vmem:[%s0 + $0xd4] sm:$0xf]
  %v152 = vld [vmem:[%s0 + $0xd8] sm:$0xf]
  %v153 = vld [vmem:[%s0 + $0xdc] sm:$0xf]
  %v154 = vld [vmem:[%s0 + $0xe0] sm:$0xf]
  %v155 = vld [vmem:[%s0 + $0xe4] sm:$0xf]
  %v156 = vld [vmem:[%s0 + $0xe8] sm:$0xf]
  %v157 = vld [vmem:[%s0 + $0xec] sm:$0xf]
  %v158 = vld [vmem:[%s0 + $0xf0] sm:$0xf]
  %v159 = vld [vmem:[%s0 + $0xf4] sm:$0xf]
  %v160 = vld [vmem:[%s0 + $0xf8] sm:$0xf]
  %v161 = vld [vmem:[%s0 + $0xfc] sm:$0xf]
  %v162 = vld [vmem:[%s0 + $0x100] sm:$0xf]
  %v163 = vld [vmem:[%s0 + $0x104] sm:$0xf]
  %v164 = vld [vmem:[%s0 + $0x108] sm:$0xf]
  %v165 = vld [vmem:[%s0 + $0x10c] sm:$0xf]
  %v166 = vld [vmem:[%s0 + $0x110] sm:$0xf]
  %v167 = vld [vmem:[%s0 + $0x114] sm:$0xf]
  %v168 = vld [vmem:[%s0 + $0x118] sm:$0xf]
  %v169 = vld [vmem:[%s0 + $0x11c] sm:$0xf]
  %v170 = vld [vmem:[%s0 + $0x120] sm:$0xf]
  %v171 = vld [vmem:[%s0 + $0x124] sm:$0xf]
  %v172 = vld [vmem:[%s0 + $0x128] sm:$0xf]
  %v173 = vld [vmem:[%s0 + $0x12c] sm:$0xf]
  %v174 = vld [vmem:[%s0 + $0x130] sm:$0xf]
  %v175 = vld [vmem:[%s0 + $0x134] sm:$0xf]
  %v176 = vld [vmem:[%s0 + $0x138] sm:$0xf]
  %v177 = vld [vmem:[%s0 + $0x13c] sm:$0xf]
  %v178 = vld [vmem:[%s0 + $0x140] sm:$0xf]
  %v179 = vld [vmem:[%s0 + $0x144] sm:$0xf]
  %v180 = vld [vmem:[%s0 + $0x148] sm:$0xf]
  %v181 = vld [vmem:[%s0 + $0x14c] sm:$0xf]
  %v182 = vld [vmem:[%s0 + $0x150] sm:$0xf]
  %v183 = vld [vmem:[%s0 + $0x154] sm:$0xf]
  %v184 = vld [vmem:[%s0 + $0x158] sm:$0xf]
  %v185 = vld [vmem:[%s0 + $0x15c] sm:$0xf]
  %v186 = vld [vmem:[%s0 + $0x160] sm:$0xf]
  %v187 = vld [vmem:[%s0 + $0x164] sm:$0xf]
  %v188 = vld [vmem:[%s0 + $0x168] sm:$0xf]
  %v189 = vld [vmem:[%s0 + $0x16c] sm:$0xf]
  %v190 = vld [vmem:[%s0 + $0x170] sm:$0xf]
  %v191 = vld [vmem:[%s0 + $0x174] sm:$0xf]
  %v192 = vld [vmem:[%s0 + $0x178] sm:$0xf]
  %v193 = vld [vmem:[%s0 + $0x17c] sm:$0xf]
  %v194 = vld [vmem:[%s0 + $0x180] sm:$0xf]
  %v195 = vld [vmem:[%s0 + $0x184] sm:$0xf]
  %v196 = vld [vmem:[%s0 + $0x188] sm:$0xf]
  %v197 = vld [vmem:[%s0 + $0x18c] sm:$0xf]
  %v198 = vld [vmem:[%s0 + $0x190] sm:$0xf]
  %v199 = vld [vmem:[%s0 + $0x194] sm:$0xf]
  %v200 = vld [vmem:[%s0 + $0x198] sm:$0xf]
  %v201 = vld [vmem:[%s0 + $0x19c] sm:$0xf]
  %v202 = vld [vmem:[%s0 + $0x1a0] sm:$0xf]
  %v203 = vld [vmem:[%s0 + $0x1a4] sm:$0xf]
  %v204 = vld [vmem:[%s0 + $0x1a8] sm:$0xf]
  %v205 = vld [vmem:[%s0 + $0x1ac] sm:$0xf]
  %v206 = vld [vmem:[%s0 + $0x1b0] sm:$0xf]
  %v207 = vld [vmem:[%s0 + $0x1b4] sm:$0xf]
  %v208 = vld [vmem:[%s0 + $0x1b8] sm:$0xf]
  %v209 = vld [vmem:[%s0 + $0x1bc] sm:$0xf]
  %v210 = vld [vmem:[%s0 + $0x1c0] sm:$0xf]
  %v211 = vld [vmem:[%s0 + $0x1c4] sm:$0xf]
  %v212 = vld [vmem:[%s0 + $0x1c8] sm:$0xf]
  %v213 = vld [vmem:[%s0 + $0x1cc] sm:$0xf]
  %v214 = vld [vmem:[%s0 + $0x1d0] sm:$0xf]
  %v215 = vld [vmem:[%s0 + $0x1d4] sm:$0xf]
  %v216 = vld [vmem:[%s0 + $0x1d8] sm:$0xf]
  %v217 = vld [vmem:[%s0 + $0x1dc] sm:$0xf]
  %v218 = vld [vmem:[%s0 + $0x1e0] sm:$0xf]
  %v219 = vld [vmem:[%s0 + $0x1e4] sm:$0xf]
  %v220 = vld [vmem:[%s0 + $0x1e8] sm:$0xf]
  %v221 = vld [vmem:[%s0 + $0x1ec] sm:$0xf]
  %v222 = vld [vmem:[%s0 + $0x1f0] sm:$0xf]
  %v223 = vld [vmem:[%s0 + $0x1f4] sm:$0xf]
  %v224 = vld [vmem:[%s0 + $0x1f8] sm:$0xf]
  %v225 = vld [vmem:[%s0 + $0x1fc] sm:$0xf]
  %v226 = vld [vmem:[%s0 + $0x200] sm:$0xf]
  %v227 = vld [vmem:[%s0 + $0x204] sm:$0xf]
  %v228 = vld [vmem:[%s0 + $0x208] sm:$0xf]
  %v229 = vld [vmem:[%s0 + $0x20c] sm:$0xf]
  %v230 = vld [vmem:[%s0 + $0x210] sm:$0xf]
  %v231 = vld [vmem:[%s0 + $0x214] sm:$0xf]
  %v232 = vld [vmem:[%s0 + $0x218] sm:$0xf]
  %v233 = vld [vmem:[%s0 + $0x21c] sm:$0xf]
  %v234 = vld [vmem:[%s0 + $0x220] sm:$0xf]
  %v235 = vld [vmem:[%s0 + $0x224] sm:$0xf]
  %v236 = vld [vmem:[%s0 + $0x228] sm:$0xf]
  %v237 = vld [vmem:[%s0 + $0x22c] sm:$0xf]
  %v238 = vld [vmem:[%s0 + $0x230] sm:$0xf]
  %v239 = vld [vmem:[%s0 + $0x234] sm:$0xf]
  %v240 = vld [vmem:[%s0 + $0x238] sm:$0xf]
  %v241 = vld [vmem:[%s0 + $0x23c] sm:$0xf]
  %v242 = vld [vmem:[%s0 + $0x240] sm:$0xf]
  %v243 = vld [vmem:[%s0 + $0x244] sm:$0xf]
  %v244 = vld [vmem:[%s0 + $0x248] sm:$0xf]
  %v245 = vld [vmem:[%s0 + $0x24c] sm:$0xf]
  %v246 = vld [vmem:[%s0 + $0x250] sm:$0xf]
  %v247 = vld [vmem:[%s0 + $0x254] sm:$0xf]
  %v248 = vld [vmem:[%s0 + $0x258] sm:$0xf]
  %v249 = vld [vmem:[%s0 + $0x25c] sm:$0xf]
  %v250 = vld [vmem:[%s0 + $0x260] sm:$0xf]
  %v251 = vld [vmem:[%s0 + $0x264] sm:$0xf]
  %v252 = vld [vmem:[%s0 + $0x268] sm:$0xf]
  %v253 = vld [vmem:[%s0 + $0x26c] sm:$0xf]
  %v254 = vld [vmem:[%s0 + $0x270] sm:$0xf]
  %v255 = vld [vmem:[%s0 + $0x274] sm:$0xf]
  %v256 = vld [vmem:[%s0 + $0x278] sm:$0xf]
  %v257 = vld [vmem:[%s0 + $0x27c] sm:$0xf]
  %v338 = vunpack.c.l.b16 %v18
  %v339 = vunpack.c.h.b16 %v18
  %v340 = vunpack.c.l.b16 %v19
  %v341 = vunpack.c.h.b16 %v19
  %v342 = vunpack.c.l.b16 %v20
  %v343 = vunpack.c.h.b16 %v20
  %v344 = vunpack.c.l.b16 %v21
  %v345 = vunpack.c.h.b16 %v21
  %v346 = vunpack.c.l.b16 %v22
  %v347 = vunpack.c.h.b16 %v22
  %v348 = vunpack.c.l.b16 %v23
  %v349 = vunpack.c.h.b16 %v23
  %v350 = vunpack.c.l.b16 %v24
  %v351 = vunpack.c.h.b16 %v24
  %v352 = vunpack.c.l.b16 %v25
  %v353 = vunpack.c.h.b16 %v25
  %v354 = vunpack.c.l.b16 %v26
  %v355 = vunpack.c.h.b16 %v26
  %v356 = vunpack.c.l.b16 %v27
  %v357 = vunpack.c.h.b16 %v27
  %v358 = vunpack.c.l.b16 %v28
  %v359 = vunpack.c.h.b16 %v28
  %v360 = vunpack.c.l.b16 %v29
  %v361 = vunpack.c.h.b16 %v29
  %v362 = vunpack.c.l.b16 %v30
  %v363 = vunpack.c.h.b16 %v30
  %v364 = vunpack.c.l.b16 %v31
  %v365 = vunpack.c.h.b16 %v31
  %v366 = vunpack.c.l.b16 %v32
  %v367 = vunpack.c.h.b16 %v32
  %v368 = vunpack.c.l.b16 %v33
  %v369 = vunpack.c.h.b16 %v33
  %v370 = vunpack.c.l.b16 %v34
  %v371 = vunpack.c.h.b16 %v34
  %v372 = vunpack.c.l.b16 %v35
  %v373 = vunpack.c.h.b16 %v35
  %v374 = vunpack.c.l.b16 %v36
  %v375 = vunpack.c.h.b16 %v36
  %v376 = vunpack.c.l.b16 %v37
  %v377 = vunpack.c.h.b16 %v37
  %v378 = vunpack.c.l.b16 %v38
  %v379 = vunpack.c.h.b16 %v38
  %v380 = vunpack.c.l.b16 %v39
  %v381 = vunpack.c.h.b16 %v39
  %v382 = vunpack.c.l.b16 %v40
  %v383 = vunpack.c.h.b16 %v40
  %v384 = vunpack.c.l.b16 %v41
  %v385 = vunpack.c.h.b16 %v41
  %v386 = vunpack.c.l.b16 %v42
  %v387 = vunpack.c.h.b16 %v42
  %v388 = vunpack.c.l.b16 %v43
  %v389 = vunpack.c.h.b16 %v43
  %v390 = vunpack.c.l.b16 %v44
  %v391 = vunpack.c.h.b16 %v44
  %v392 = vunpack.c.l.b16 %v45
  %v393 = vunpack.c.h.b16 %v45
  %v394 = vunpack.c.l.b16 %v46
  %v395 = vunpack.c.h.b16 %v46
  %v396 = vunpack.c.l.b16 %v47
  %v397 = vunpack.c.h.b16 %v47
  %v398 = vunpack.c.l.b16 %v48
  %v399 = vunpack.c.h.b16 %v48
  %v400 = vunpack.c.l.b16 %v49
  %v401 = vunpack.c.h.b16 %v49
  %v402 = vunpack.c.l.b16 %v50
  %v403 = vunpack.c.h.b16 %v50
  %v404 = vunpack.c.l.b16 %v51
  %v405 = vunpack.c.h.b16 %v51
  %v406 = vunpack.c.l.b16 %v52
  %v407 = vunpack.c.h.b16 %v52
  %v408 = vunpack.c.l.b16 %v53
  %v409 = vunpack.c.h.b16 %v53
  %v410 = vunpack.c.l.b16 %v54
  %v411 = vunpack.c.h.b16 %v54
  %v412 = vunpack.c.l.b16 %v55
  %v413 = vunpack.c.h.b16 %v55
  %v414 = vunpack.c.l.b16 %v56
  %v415 = vunpack.c.h.b16 %v56
  %v416 = vunpack.c.l.b16 %v57
  %v417 = vunpack.c.h.b16 %v57
  %v418 = vunpack.c.l.b16 %v58
  %v419 = vunpack.c.h.b16 %v58
  %v420 = vunpack.c.l.b16 %v59
  %v421 = vunpack.c.h.b16 %v59
  %v422 = vunpack.c.l.b16 %v60
  %v423 = vunpack.c.h.b16 %v60
  %v424 = vunpack.c.l.b16 %v61
  %v425 = vunpack.c.h.b16 %v61
  %v426 = vunpack.c.l.b16 %v62
  %v427 = vunpack.c.h.b16 %v62
  %v428 = vunpack.c.l.b16 %v63
  %v429 = vunpack.c.h.b16 %v63
  %v430 = vunpack.c.l.b16 %v64
  %v431 = vunpack.c.h.b16 %v64
  %v432 = vunpack.c.l.b16 %v65
  %v433 = vunpack.c.h.b16 %v65
  %v434 = vunpack.c.l.b16 %v66
  %v435 = vunpack.c.h.b16 %v66
  %v436 = vunpack.c.l.b16 %v67
  %v437 = vunpack.c.h.b16 %v67
  %v438 = vunpack.c.l.b16 %v68
  %v439 = vunpack.c.h.b16 %v68
  %v440 = vunpack.c.l.b16 %v69
  %v441 = vunpack.c.h.b16 %v69
  %v442 = vunpack.c.l.b16 %v70
  %v443 = vunpack.c.h.b16 %v70
  %v444 = vunpack.c.l.b16 %v71
  %v445 = vunpack.c.h.b16 %v71
  %v446 = vunpack.c.l.b16 %v72
  %v447 = vunpack.c.h.b16 %v72
  %v448 = vunpack.c.l.b16 %v73
  %v449 = vunpack.c.h.b16 %v73
  %v450 = vunpack.c.l.b16 %v74
  %v451 = vunpack.c.h.b16 %v74
  %v452 = vunpack.c.l.b16 %v75
  %v453 = vunpack.c.h.b16 %v75
  %v454 = vunpack.c.l.b16 %v76
  %v455 = vunpack.c.h.b16 %v76
  %v456 = vunpack.c.l.b16 %v77
  %v457 = vunpack.c.h.b16 %v77
  %v458 = vunpack.c.l.b16 %v78
  %v459 = vunpack.c.h.b16 %v78
  %v460 = vunpack.c.l.b16 %v79
  %v461 = vunpack.c.h.b16 %v79
  %v462 = vunpack.c.l.b16 %v80
  %v463 = vunpack.c.h.b16 %v80
  %v464 = vunpack.c.l.b16 %v81
  %v465 = vunpack.c.h.b16 %v81
  %v466 = vunpack.c.l.b16 %v82
  %v467 = vunpack.c.h.b16 %v82
  %v468 = vunpack.c.l.b16 %v83
  %v469 = vunpack.c.h.b16 %v83
  %v470 = vunpack.c.l.b16 %v84
  %v471 = vunpack.c.h.b16 %v84
  %v472 = vunpack.c.l.b16 %v85
  %v473 = vunpack.c.h.b16 %v85
  %v474 = vunpack.c.l.b16 %v86
  %v475 = vunpack.c.h.b16 %v86
  %v476 = vunpack.c.l.b16 %v87
  %v477 = vunpack.c.h.b16 %v87
  %v478 = vunpack.c.l.b16 %v88
  %v479 = vunpack.c.h.b16 %v88
  %v480 = vunpack.c.l.b16 %v89
  %v481 = vunpack.c.h.b16 %v89
  %v482 = vunpack.c.l.b16 %v90
  %v483 = vunpack.c.h.b16 %v90
  %v484 = vunpack.c.l.b16 %v91
  %v485 = vunpack.c.h.b16 %v91
  %v486 = vunpack.c.l.b16 %v92
  %v487 = vunpack.c.h.b16 %v92
  %v488 = vunpack.c.l.b16 %v93
  %v489 = vunpack.c.h.b16 %v93
  %v490 = vunpack.c.l.b16 %v94
  %v491 = vunpack.c.h.b16 %v94
  %v492 = vunpack.c.l.b16 %v95
  %v493 = vunpack.c.h.b16 %v95
  %v494 = vunpack.c.l.b16 %v96
  %v495 = vunpack.c.h.b16 %v96
  %v496 = vunpack.c.l.b16 %v97
  %v497 = vunpack.c.h.b16 %v97
  %v498 = vpack.c.b16 %v348, %v338
  %v499 = vpack.c.b16 %v349, %v339
  %v500 = vpack.c.b16 %v350, %v340
  %v501 = vpack.c.b16 %v351, %v341
  %v502 = vpack.c.b16 %v352, %v342
  %v503 = vpack.c.b16 %v353, %v343
  %v504 = vpack.c.b16 %v354, %v344
  %v505 = vpack.c.b16 %v355, %v345
  %v506 = vpack.c.b16 %v356, %v346
  %v507 = vpack.c.b16 %v357, %v347
  %v508 = vpack.c.b16 %v368, %v358
  %v509 = vpack.c.b16 %v369, %v359
  %v510 = vpack.c.b16 %v370, %v360
  %v511 = vpack.c.b16 %v371, %v361
  %v512 = vpack.c.b16 %v372, %v362
  %v513 = vpack.c.b16 %v373, %v363
  %v514 = vpack.c.b16 %v374, %v364
  %v515 = vpack.c.b16 %v375, %v365
  %v516 = vpack.c.b16 %v376, %v366
  %v517 = vpack.c.b16 %v377, %v367
  %v518 = vpack.c.b16 %v388, %v378
  %v519 = vpack.c.b16 %v389, %v379
  %v520 = vpack.c.b16 %v390, %v380
  %v521 = vpack.c.b16 %v391, %v381
  %v522 = vpack.c.b16 %v392, %v382
  %v523 = vpack.c.b16 %v393, %v383
  %v524 = vpack.c.b16 %v394, %v384
  %v525 = vpack.c.b16 %v395, %v385
  %v526 = vpack.c.b16 %v396, %v386
  %v527 = vpack.c.b16 %v397, %v387
  %v528 = vpack.c.b16 %v408, %v398
  %v529 = vpack.c.b16 %v409, %v399
  %v530 = vpack.c.b16 %v410, %v400
  %v531 = vpack.c.b16 %v411, %v401
  %v532 = vpack.c.b16 %v412, %v402
  %v533 = vpack.c.b16 %v413, %v403
  %v534 = vpack.c.b16 %v414, %v404
  %v535 = vpack.c.b16 %v415, %v405
  %v536 = vpack.c.b16 %v416, %v406
  %v537 = vpack.c.b16 %v417, %v407
  %v538 = vpack.c.b16 %v428, %v418
  %v539 = vpack.c.b16 %v429, %v419
  %v540 = vpack.c.b16 %v430, %v420
  %v541 = vpack.c.b16 %v431, %v421
  %v542 = vpack.c.b16 %v432, %v422
  %v543 = vpack.c.b16 %v433, %v423
  %v544 = vpack.c.b16 %v434, %v424
  %v545 = vpack.c.b16 %v435, %v425
  %v546 = vpack.c.b16 %v436, %v426
  %v547 = vpack.c.b16 %v437, %v427
  %v548 = vpack.c.b16 %v448, %v438
  %v549 = vpack.c.b16 %v449, %v439
  %v550 = vpack.c.b16 %v450, %v440
  %v551 = vpack.c.b16 %v451, %v441
  %v552 = vpack.c.b16 %v452, %v442
  %v553 = vpack.c.b16 %v453, %v443
  %v554 = vpack.c.b16 %v454, %v444
  %v555 = vpack.c.b16 %v455, %v445
  %v556 = vpack.c.b16 %v456, %v446
  %v557 = vpack.c.b16 %v457, %v447
  %v558 = vpack.c.b16 %v468, %v458
  %v559 = vpack.c.b16 %v469, %v459
  %v560 = vpack.c.b16 %v470, %v460
  %v561 = vpack.c.b16 %v471, %v461
  %v562 = vpack.c.b16 %v472, %v462
  %v563 = vpack.c.b16 %v473, %v463
  %v564 = vpack.c.b16 %v474, %v464
  %v565 = vpack.c.b16 %v475, %v465
  %v566 = vpack.c.b16 %v476, %v466
  %v567 = vpack.c.b16 %v477, %v467
  %v568 = vpack.c.b16 %v488, %v478
  %v569 = vpack.c.b16 %v489, %v479
  %v570 = vpack.c.b16 %v490, %v480
  %v571 = vpack.c.b16 %v491, %v481
  %v572 = vpack.c.b16 %v492, %v482
  %v573 = vpack.c.b16 %v493, %v483
  %v574 = vpack.c.b16 %v494, %v484
  %v575 = vpack.c.b16 %v495, %v485
  %v576 = vpack.c.b16 %v496, %v486
  %v577 = vpack.c.b16 %v497, %v487
  %v818 = vunpack.c.l.b16 %v98
  %v819 = vunpack.c.l.b16 %v99
  %v820 = vunpack.c.l.b16 %v100
  %v821 = vunpack.c.l.b16 %v101
  %v822 = vunpack.c.l.b16 %v102
  %v823 = vunpack.c.l.b16 %v103
  %v824 = vunpack.c.l.b16 %v104
  %v825 = vunpack.c.l.b16 %v105
  %v826 = vunpack.c.l.b16 %v106
  %v827 = vunpack.c.l.b16 %v107
  %v828 = vunpack.c.l.b16 %v108
  %v829 = vunpack.c.l.b16 %v109
  %v830 = vunpack.c.l.b16 %v110
  %v831 = vunpack.c.l.b16 %v111
  %v832 = vunpack.c.l.b16 %v112
  %v833 = vunpack.c.l.b16 %v113
  %v834 = vunpack.c.l.b16 %v114
  %v835 = vunpack.c.l.b16 %v115
  %v836 = vunpack.c.l.b16 %v116
  %v837 = vunpack.c.l.b16 %v117
  %v838 = vunpack.c.l.b16 %v118
  %v839 = vunpack.c.l.b16 %v119
  %v840 = vunpack.c.l.b16 %v120
  %v841 = vunpack.c.l.b16 %v121
  %v842 = vunpack.c.l.b16 %v122
  %v843 = vunpack.c.l.b16 %v123
  %v844 = vunpack.c.l.b16 %v124
  %v845 = vunpack.c.l.b16 %v125
  %v846 = vunpack.c.l.b16 %v126
  %v847 = vunpack.c.l.b16 %v127
  %v848 = vunpack.c.l.b16 %v128
  %v849 = vunpack.c.l.b16 %v129
  %v850 = vunpack.c.l.b16 %v130
  %v851 = vunpack.c.l.b16 %v131
  %v852 = vunpack.c.l.b16 %v132
  %v853 = vunpack.c.l.b16 %v133
  %v854 = vunpack.c.l.b16 %v134
  %v855 = vunpack.c.l.b16 %v135
  %v856 = vunpack.c.l.b16 %v136
  %v857 = vunpack.c.l.b16 %v137
  %v858 = vunpack.c.l.b16 %v138
  %v859 = vunpack.c.l.b16 %v139
  %v860 = vunpack.c.l.b16 %v140
  %v861 = vunpack.c.l.b16 %v141
  %v862 = vunpack.c.l.b16 %v142
  %v863 = vunpack.c.l.b16 %v143
  %v864 = vunpack.c.l.b16 %v144
  %v865 = vunpack.c.l.b16 %v145
  %v866 = vunpack.c.l.b16 %v146
  %v867 = vunpack.c.l.b16 %v147
  %v868 = vunpack.c.l.b16 %v148
  %v869 = vunpack.c.l.b16 %v149
  %v870 = vunpack.c.l.b16 %v150
  %v871 = vunpack.c.l.b16 %v151
  %v872 = vunpack.c.l.b16 %v152
  %v873 = vunpack.c.l.b16 %v153
  %v874 = vunpack.c.l.b16 %v154
  %v875 = vunpack.c.l.b16 %v155
  %v876 = vunpack.c.l.b16 %v156
  %v877 = vunpack.c.l.b16 %v157
  %v878 = vunpack.c.l.b16 %v158
  %v879 = vunpack.c.l.b16 %v159
  %v880 = vunpack.c.l.b16 %v160
  %v881 = vunpack.c.l.b16 %v161
  %v882 = vunpack.c.l.b16 %v162
  %v883 = vunpack.c.l.b16 %v163
  %v884 = vunpack.c.l.b16 %v164
  %v885 = vunpack.c.l.b16 %v165
  %v886 = vunpack.c.l.b16 %v166
  %v887 = vunpack.c.l.b16 %v167
  %v888 = vunpack.c.l.b16 %v168
  %v889 = vunpack.c.l.b16 %v169
  %v890 = vunpack.c.l.b16 %v170
  %v891 = vunpack.c.l.b16 %v171
  %v892 = vunpack.c.l.b16 %v172
  %v893 = vunpack.c.l.b16 %v173
  %v894 = vunpack.c.l.b16 %v174
  %v895 = vunpack.c.l.b16 %v175
  %v896 = vunpack.c.l.b16 %v176
  %v897 = vunpack.c.l.b16 %v177
  %v898 = vunpack.c.l.b16 %v178
  %v899 = vunpack.c.l.b16 %v179
  %v900 = vunpack.c.l.b16 %v180
  %v901 = vunpack.c.l.b16 %v181
  %v902 = vunpack.c.l.b16 %v182
  %v903 = vunpack.c.l.b16 %v183
  %v904 = vunpack.c.l.b16 %v184
  %v905 = vunpack.c.l.b16 %v185
  %v906 = vunpack.c.l.b16 %v186
  %v907 = vunpack.c.l.b16 %v187
  %v908 = vunpack.c.l.b16 %v188
  %v909 = vunpack.c.l.b16 %v189
  %v910 = vunpack.c.l.b16 %v190
  %v911 = vunpack.c.l.b16 %v191
  %v912 = vunpack.c.l.b16 %v192
  %v913 = vunpack.c.l.b16 %v193
  %v914 = vunpack.c.l.b16 %v194
  %v915 = vunpack.c.l.b16 %v195
  %v916 = vunpack.c.l.b16 %v196
  %v917 = vunpack.c.l.b16 %v197
  %v918 = vunpack.c.l.b16 %v198
  %v919 = vunpack.c.l.b16 %v199
  %v920 = vunpack.c.l.b16 %v200
  %v921 = vunpack.c.l.b16 %v201
  %v922 = vunpack.c.l.b16 %v202
  %v923 = vunpack.c.l.b16 %v203
  %v924 = vunpack.c.l.b16 %v204
  %v925 = vunpack.c.l.b16 %v205
  %v926 = vunpack.c.l.b16 %v206
  %v927 = vunpack.c.l.b16 %v207
  %v928 = vunpack.c.l.b16 %v208
  %v929 = vunpack.c.l.b16 %v209
  %v930 = vunpack.c.l.b16 %v210
  %v931 = vunpack.c.l.b16 %v211
  %v932 = vunpack.c.l.b16 %v212
  %v933 = vunpack.c.l.b16 %v213
  %v934 = vunpack.c.l.b16 %v214
  %v935 = vunpack.c.l.b16 %v215
  %v936 = vunpack.c.l.b16 %v216
  %v937 = vunpack.c.l.b16 %v217
  %v938 = vunpack.c.l.b16 %v218
  %v939 = vunpack.c.l.b16 %v219
  %v940 = vunpack.c.l.b16 %v220
  %v941 = vunpack.c.l.b16 %v221
  %v942 = vunpack.c.l.b16 %v222
  %v943 = vunpack.c.l.b16 %v223
  %v944 = vunpack.c.l.b16 %v224
  %v945 = vunpack.c.l.b16 %v225
  %v946 = vunpack.c.l.b16 %v226
  %v947 = vunpack.c.l.b16 %v227
  %v948 = vunpack.c.l.b16 %v228
  %v949 = vunpack.c.l.b16 %v229
  %v950 = vunpack.c.l.b16 %v230
  %v951 = vunpack.c.l.b16 %v231
  %v952 = vunpack.c.l.b16 %v232
  %v953 = vunpack.c.l.b16 %v233
  %v954 = vunpack.c.l.b16 %v234
  %v955 = vunpack.c.l.b16 %v235
  %v956 = vunpack.c.l.b16 %v236
  %v957 = vunpack.c.l.b16 %v237
  %v958 = vunpack.c.l.b16 %v238
  %v959 = vunpack.c.l.b16 %v239
  %v960 = vunpack.c.l.b16 %v240
  %v961 = vunpack.c.l.b16 %v241
  %v962 = vunpack.c.l.b16 %v242
  %v963 = vunpack.c.l.b16 %v243
  %v964 = vunpack.c.l.b16 %v244
  %v965 = vunpack.c.l.b16 %v245
  %v966 = vunpack.c.l.b16 %v246
  %v967 = vunpack.c.l.b16 %v247
  %v968 = vunpack.c.l.b16 %v248
  %v969 = vunpack.c.l.b16 %v249
  %v970 = vunpack.c.l.b16 %v250
  %v971 = vunpack.c.l.b16 %v251
  %v972 = vunpack.c.l.b16 %v252
  %v973 = vunpack.c.l.b16 %v253
  %v974 = vunpack.c.l.b16 %v254
  %v975 = vunpack.c.l.b16 %v255
  %v976 = vunpack.c.l.b16 %v256
  %v977 = vunpack.c.l.b16 %v257
  %v978 = vpack.c.b16 %v819, %v818
  %v979 = vpack.c.b16 %v821, %v820
  %v980 = vpack.c.b16 %v823, %v822
  %v981 = vpack.c.b16 %v825, %v824
  %v982 = vpack.c.b16 %v827, %v826
  %v983 = vpack.c.b16 %v829, %v828
  %v984 = vpack.c.b16 %v831, %v830
  %v985 = vpack.c.b16 %v833, %v832
  %v986 = vpack.c.b16 %v835, %v834
  %v987 = vpack.c.b16 %v837, %v836
  %v988 = vpack.c.b16 %v839, %v838
  %v989 = vpack.c.b16 %v841, %v840
  %v990 = vpack.c.b16 %v843, %v842
  %v991 = vpack.c.b16 %v845, %v844
  %v992 = vpack.c.b16 %v847, %v846
  %v993 = vpack.c.b16 %v849, %v848
  %v994 = vpack.c.b16 %v851, %v850
  %v995 = vpack.c.b16 %v853, %v852
  %v996 = vpack.c.b16 %v855, %v854
  %v997 = vpack.c.b16 %v857, %v856
  %v998 = vpack.c.b16 %v859, %v858
  %v999 = vpack.c.b16 %v861, %v860
  %v1000 = vpack.c.b16 %v863, %v862
  %v1001 = vpack.c.b16 %v865, %v864
  %v1002 = vpack.c.b16 %v867, %v866
  %v1003 = vpack.c.b16 %v869, %v868
  %v1004 = vpack.c.b16 %v871, %v870
  %v1005 = vpack.c.b16 %v873, %v872
  %v1006 = vpack.c.b16 %v875, %v874
  %v1007 = vpack.c.b16 %v877, %v876
  %v1008 = vpack.c.b16 %v879, %v878
  %v1009 = vpack.c.b16 %v881, %v880
  %v1010 = vpack.c.b16 %v883, %v882
  %v1011 = vpack.c.b16 %v885, %v884
  %v1012 = vpack.c.b16 %v887, %v886
  %v1013 = vpack.c.b16 %v889, %v888
  %v1014 = vpack.c.b16 %v891, %v890
  %v1015 = vpack.c.b16 %v893, %v892
  %v1016 = vpack.c.b16 %v895, %v894
  %v1017 = vpack.c.b16 %v897, %v896
  %v1018 = vpack.c.b16 %v899, %v898
  %v1019 = vpack.c.b16 %v901, %v900
  %v1020 = vpack.c.b16 %v903, %v902
  %v1021 = vpack.c.b16 %v905, %v904
  %v1022 = vpack.c.b16 %v907, %v906
  %v1023 = vpack.c.b16 %v909, %v908
  %v1024 = vpack.c.b16 %v911, %v910
  %v1025 = vpack.c.b16 %v913, %v912
  %v1026 = vpack.c.b16 %v915, %v914
  %v1027 = vpack.c.b16 %v917, %v916
  %v1028 = vpack.c.b16 %v919, %v918
  %v1029 = vpack.c.b16 %v921, %v920
  %v1030 = vpack.c.b16 %v923, %v922
  %v1031 = vpack.c.b16 %v925, %v924
  %v1032 = vpack.c.b16 %v927, %v926
  %v1033 = vpack.c.b16 %v929, %v928
  %v1034 = vpack.c.b16 %v931, %v930
  %v1035 = vpack.c.b16 %v933, %v932
  %v1036 = vpack.c.b16 %v935, %v934
  %v1037 = vpack.c.b16 %v937, %v936
  %v1038 = vpack.c.b16 %v939, %v938
  %v1039 = vpack.c.b16 %v941, %v940
  %v1040 = vpack.c.b16 %v943, %v942
  %v1041 = vpack.c.b16 %v945, %v944
  %v1042 = vpack.c.b16 %v947, %v946
  %v1043 = vpack.c.b16 %v949, %v948
  %v1044 = vpack.c.b16 %v951, %v950
  %v1045 = vpack.c.b16 %v953, %v952
  %v1046 = vpack.c.b16 %v955, %v954
  %v1047 = vpack.c.b16 %v957, %v956
  %v1048 = vpack.c.b16 %v959, %v958
  %v1049 = vpack.c.b16 %v961, %v960
  %v1050 = vpack.c.b16 %v963, %v962
  %v1051 = vpack.c.b16 %v965, %v964
  %v1052 = vpack.c.b16 %v967, %v966
  %v1053 = vpack.c.b16 %v969, %v968
  %v1054 = vpack.c.b16 %v971, %v970
  %v1055 = vpack.c.b16 %v973, %v972
  %v1056 = vpack.c.b16 %v975, %v974
  %v1057 = vpack.c.b16 %v977, %v976
  %1138 = vmatprep.subr.bf16.mxu0 0
  %1139 = vmatpush1.bf16.msra.mxu0 %v978
  %1140 = vmatprep.subr.bf16.mxu0 0
  %1141 = vmatpush1.bf16.msra.mxu0 %v979
  %1142 = vmatprep.subr.bf16.mxu0 0
  %1143 = vmatpush1.bf16.msra.mxu0 %v980
  %1144 = vmatprep.subr.bf16.mxu0 0
  %1145 = vmatpush1.bf16.msra.mxu0 %v981
  %1146 = vmatprep.subr.bf16.mxu0 0
  %1147 = vmatpush1.bf16.msra.mxu0 %v982
  %1148 = vmatprep.subr.bf16.mxu0 0
  %1149 = vmatpush1.bf16.msra.mxu0 %v983
  %1150 = vmatprep.subr.bf16.mxu0 0
  %1151 = vmatpush1.bf16.msra.mxu0 %v984
  %1152 = vmatprep.subr.bf16.mxu0 0
  %1153 = vmatpush1.bf16.msra.mxu0 %v985
  %1154 = vmatprep.subr.bf16.mxu0 0
  %1155 = vmatpush1.bf16.msra.mxu0 %v986
  %1156 = vmatprep.subr.bf16.mxu0 0
  %1157 = vmatpush1.bf16.msra.mxu0 %v987
  %1158 = vmatprep.subr.bf16.mxu0 0
  %1159 = vmatpush1.bf16.msra.mxu0 %v988
  %1160 = vmatprep.subr.bf16.mxu0 0
  %1161 = vmatpush1.bf16.msra.mxu0 %v989
  %1162 = vmatprep.subr.bf16.mxu0 0
  %1163 = vmatpush1.bf16.msra.mxu0 %v990
  %1164 = vmatprep.subr.bf16.mxu0 0
  %1165 = vmatpush1.bf16.msra.mxu0 %v991
  %1166 = vmatprep.subr.bf16.mxu0 0
  %1167 = vmatpush1.bf16.msra.mxu0 %v992
  %1168 = vmatprep.subr.bf16.mxu0 0
  %1169 = vmatpush1.bf16.msra.mxu0 %v993
  %1170 = vmatprep.mubr.bf16.mxu0 %v499
  %1171 = vmatmul.mubr.bf16.gmra.mrb[0].mxu0 %v498
  %v1172 = vpop.f32.mrb[0].mxu0
  %v1173 = vadd.f32 0.0, %v1172
  %v1174 = vpop.f32.mrb[0].mxu0
  %v1175 = vpop.f32.mrb[0].mxu0
  %v1176 = vadd.f32 0.0, %v1175
  %v1177 = vpop.f32.mrb[0].mxu0
  %1178 = vmatprep.mubr.bf16.mxu0 %v509
  %1179 = vmatmul.mubr.bf16.gmra.mrb[0].mxu0 %v508
  %v1180 = vpop.f32.mrb[0].mxu0
  %v1181 = vadd.f32 0.0, %v1180
  %v1182 = vpop.f32.mrb[0].mxu0
  %v1183 = vpop.f32.mrb[0].mxu0
  %v1184 = vadd.f32 0.0, %v1183
  %v1185 = vpop.f32.mrb[0].mxu0
  %1186 = vmatprep.mubr.bf16.mxu0 %v519
  %1187 = vmatmul.mubr.bf16.gmra.mrb[0].mxu0 %v518
  %v1188 = vpop.f32.mrb[0].mxu0
  %v1189 = vadd.f32 0.0, %v1188
  %v1190 = vpop.f32.mrb[0].mxu0
  %v1191 = vpop.f32.mrb[0].mxu0
  %v1192 = vadd.f32 0.0, %v1191
  %v1193 = vpop.f32.mrb[0].mxu0
  %1194 = vmatprep.mubr.bf16.mxu0 %v529
  %1195 = vmatmul.mubr.bf16.gmra.mrb[0].mxu0 %v528
  %v1196 = vpop.f32.mrb[0].mxu0
  %v1197 = vadd.f32 0.0, %v1196
  %v1198 = vpop.f32.mrb[0].mxu0
  %v1199 = vpop.f32.mrb[0].mxu0
  %v1200 = vadd.f32 0.0, %v1199
  %v1201 = vpop.f32.mrb[0].mxu0
  %1202 = vmatprep.mubr.bf16.mxu0 %v539
  %1203 = vmatmul.mubr.bf16.gmra.mrb[0].mxu0 %v538
  %v1204 = vpop.f32.mrb[0].mxu0
  %v1205 = vadd.f32 0.0, %v1204
  %v1206 = vpop.f32.mrb[0].mxu0
  %v1207 = vpop.f32.mrb[0].mxu0
  %v1208 = vadd.f32 0.0, %v1207
  %v1209 = vpop.f32.mrb[0].mxu0
  %1210 = vmatprep.mubr.bf16.mxu0 %v549
  %1211 = vmatmul.mubr.bf16.gmra.mrb[0].mxu0 %v548
  %v1212 = vpop.f32.mrb[0].mxu0
  %v1213 = vadd.f32 0.0, %v1212
  %v1214 = vpop.f32.mrb[0].mxu0
  %v1215 = vpop.f32.mrb[0].mxu0
  %v1216 = vadd.f32 0.0, %v1215
  %v1217 = vpop.f32.mrb[0].mxu0
  %1218 = vmatprep.mubr.bf16.mxu0 %v559
  %1219 = vmatmul.mubr.bf16.gmra.mrb[0].mxu0 %v558
  %v1220 = vpop.f32.mrb[0].mxu0
  %v1221 = vadd.f32 0.0, %v1220
  %v1222 = vpop.f32.mrb[0].mxu0
  %v1223 = vpop.f32.mrb[0].mxu0
  %v1224 = vadd.f32 0.0, %v1223
  %v1225 = vpop.f32.mrb[0].mxu0
  %1226 = vmatprep.mubr.bf16.mxu0 %v569
  %1227 = vmatmul.mubr.bf16.gmra.mrb[0].mxu0 %v568
  %v1228 = vpop.f32.mrb[0].mxu0
  %v1229 = vadd.f32 0.0, %v1228
  %v1230 = vpop.f32.mrb[0].mxu0
  %v1231 = vpop.f32.mrb[0].mxu0
  %v1232 = vadd.f32 0.0, %v1231
  %v1233 = vpop.f32.mrb[0].mxu0
  %1234 = vdwg.mxu0
  %1235 = vmatprep.subr.bf16.mxu0 0
  %1236 = vmatpush1.bf16.msra.mxu0 %v994
  %1237 = vmatprep.subr.bf16.mxu0 0
  %1238 = vmatpush1.bf16.msra.mxu0 %v995
  %1239 = vmatprep.subr.bf16.mxu0 0
  %1240 = vmatpush1.bf16.msra.mxu0 %v996
  %1241 = vmatprep.subr.bf16.mxu0 0
  %1242 = vmatpush1.bf16.msra.mxu0 %v997
  %1243 = vmatprep.subr.bf16.mxu0 0
  %1244 = vmatpush1.bf16.msra.mxu0 %v998
  %1245 = vmatprep.subr.bf16.mxu0 0
  %1246 = vmatpush1.bf16.msra.mxu0 %v999
  %1247 = vmatprep.subr.bf16.mxu0 0
  %1248 = vmatpush1.bf16.msra.mxu0 %v1000
  %1249 = vmatprep.subr.bf16.mxu0 0
  %1250 = vmatpush1.bf16.msra.mxu0 %v1001
  %1251 = vmatprep.subr.bf16.mxu0 0
  %1252 = vmatpush1.bf16.msra.mxu0 %v1002
  %1253 = vmatprep.subr.bf16.mxu0 0
  %1254 = vmatpush1.bf16.msra.mxu0 %v1003
  %1255 = vmatprep.subr.bf16.mxu0 0
  %1256 = vmatpush1.bf16.msra.mxu0 %v1004
  %1257 = vmatprep.subr.bf16.mxu0 0
  %1258 = vmatpush1.bf16.msra.mxu0 %v1005
  %1259 = vmatprep.subr.bf16.mxu0 0
  %1260 = vmatpush1.bf16.msra.mxu0 %v1006
  %1261 = vmatprep.subr.bf16.mxu0 0
  %1262 = vmatpush1.bf16.msra.mxu0 %v1007
  %1263 = vmatprep.subr.bf16.mxu0 0
  %1264 = vmatpush1.bf16.msra.mxu0 %v1008
  %1265 = vmatprep.subr.bf16.mxu0 0
  %1266 = vmatpush1.bf16.msra.mxu0 %v1009
  %1267 = vmatprep.mubr.bf16.mxu0 %v501
  %1268 = vmatmul.mubr.bf16.gmra.mrb[0].mxu0 %v500
  %v1269 = vpop.f32.mrb[0].mxu0
  %v1270 = vadd.f32 %v1173, %v1269
  %v1271 = vpop.f32.mrb[0].mxu0
  %v1272 = vpop.f32.mrb[0].mxu0
  %v1273 = vadd.f32 %v1176, %v1272
  %v1274 = vpop.f32.mrb[0].mxu0
  %1275 = vmatprep.mubr.bf16.mxu0 %v511
  %1276 = vmatmul.mubr.bf16.gmra.mrb[0].mxu0 %v510
  %v1277 = vpop.f32.mrb[0].mxu0
  %v1278 = vadd.f32 %v1181, %v1277
  %v1279 = vpop.f32.mrb[0].mxu0
  %v1280 = vpop.f32.mrb[0].mxu0
  %v1281 = vadd.f32 %v1184, %v1280
  %v1282 = vpop.f32.mrb[0].mxu0
  %1283 = vmatprep.mubr.bf16.mxu0 %v521
  %1284 = vmatmul.mubr.bf16.gmra.mrb[0].mxu0 %v520
  %v1285 = vpop.f32.mrb[0].mxu0
  %v1286 = vadd.f32 %v1189, %v1285
  %v1287 = vpop.f32.mrb[0].mxu0
  %v1288 = vpop.f32.mrb[0].mxu0
  %v1289 = vadd.f32 %v1192, %v1288
  %v1290 = vpop.f32.mrb[0].mxu0
  %1291 = vmatprep.mubr.bf16.mxu0 %v531
  %1292 = vmatmul.mubr.bf16.gmra.mrb[0].mxu0 %v530
  %v1293 = vpop.f32.mrb[0].mxu0
  %v1294 = vadd.f32 %v1197, %v1293
  %v1295 = vpop.f32.mrb[0].mxu0
  %v1296 = vpop.f32.mrb[0].mxu0
  %v1297 = vadd.f32 %v1200, %v1296
  %v1298 = vpop.f32.mrb[0].mxu0
  %1299 = vmatprep.mubr.bf16.mxu0 %v541
  %1300 = vmatmul.mubr.bf16.gmra.mrb[0].mxu0 %v540
  %v1301 = vpop.f32.mrb[0].mxu0
  %v1302 = vadd.f32 %v1205, %v1301
  %v1303 = vpop.f32.mrb[0].mxu0
  %v1304 = vpop.f32.mrb[0].mxu0
  %v1305 = vadd.f32 %v1208, %v1304
  %v1306 = vpop.f32.mrb[0].mxu0
  %1307 = vmatprep.mubr.bf16.mxu0 %v551
  %1308 = vmatmul.mubr.bf16.gmra.mrb[0].mxu0 %v550
  %v1309 = vpop.f32.mrb[0].mxu0
  %v1310 = vadd.f32 %v1213, %v1309
  %v1311 = vpop.f32.mrb[0].mxu0
  %v1312 = vpop.f32.mrb[0].mxu0
  %v1313 = vadd.f32 %v1216, %v1312
  %v1314 = vpop.f32.mrb[0].mxu0
  %1315 = vmatprep.mubr.bf16.mxu0 %v561
  %1316 = vmatmul.mubr.bf16.gmra.mrb[0].mxu0 %v560
  %v1317 = vpop.f32.mrb[0].mxu0
  %v1318 = vadd.f32 %v1221, %v1317
  %v1319 = vpop.f32.mrb[0].mxu0
  %v1320 = vpop.f32.mrb[0].mxu0
  %v1321 = vadd.f32 %v1224, %v1320
  %v1322 = vpop.f32.mrb[0].mxu0
  %1323 = vmatprep.mubr.bf16.mxu0 %v571
  %1324 = vmatmul.mubr.bf16.gmra.mrb[0].mxu0 %v570
  %v1325 = vpop.f32.mrb[0].mxu0
  %v1326 = vadd.f32 %v1229, %v1325
  %v1327 = vpop.f32.mrb[0].mxu0
  %v1328 = vpop.f32.mrb[0].mxu0
  %v1329 = vadd.f32 %v1232, %v1328
  %v1330 = vpop.f32.mrb[0].mxu0
  %1331 = vdwg.mxu0
  %1332 = vmatprep.subr.bf16.mxu0 0
  %1333 = vmatpush1.bf16.msra.mxu0 %v1010
  %1334 = vmatprep.subr.bf16.mxu0 0
  %1335 = vmatpush1.bf16.msra.mxu0 %v1011
  %1336 = vmatprep.subr.bf16.mxu0 0
  %1337 = vmatpush1.bf16.msra.mxu0 %v1012
  %1338 = vmatprep.subr.bf16.mxu0 0
  %1339 = vmatpush1.bf16.msra.mxu0 %v1013
  %1340 = vmatprep.subr.bf16.mxu0 0
  %1341 = vmatpush1.bf16.msra.mxu0 %v1014
  %1342 = vmatprep.subr.bf16.mxu0 0
  %1343 = vmatpush1.bf16.msra.mxu0 %v1015
  %1344 = vmatprep.subr.bf16.mxu0 0
  %1345 = vmatpush1.bf16.msra.mxu0 %v1016
  %1346 = vmatprep.subr.bf16.mxu0 0
  %1347 = vmatpush1.bf16.msra.mxu0 %v1017
  %1348 = vmatprep.subr.bf16.mxu0 0
  %1349 = vmatpush1.bf16.msra.mxu0 %v1018
  %1350 = vmatprep.subr.bf16.mxu0 0
  %1351 = vmatpush1.bf16.msra.mxu0 %v1019
  %1352 = vmatprep.subr.bf16.mxu0 0
  %1353 = vmatpush1.bf16.msra.mxu0 %v1020
  %1354 = vmatprep.subr.bf16.mxu0 0
  %1355 = vmatpush1.bf16.msra.mxu0 %v1021
  %1356 = vmatprep.subr.bf16.mxu0 0
  %1357 = vmatpush1.bf16.msra.mxu0 %v1022
  %1358 = vmatprep.subr.bf16.mxu0 0
  %1359 = vmatpush1.bf16.msra.mxu0 %v1023
  %1360 = vmatprep.subr.bf16.mxu0 0
  %1361 = vmatpush1.bf16.msra.mxu0 %v1024
  %1362 = vmatprep.subr.bf16.mxu0 0
  %1363 = vmatpush1.bf16.msra.mxu0 %v1025
  %1364 = vmatprep.mubr.bf16.mxu0 %v503
  %1365 = vmatmul.mubr.bf16.gmra.mrb[0].mxu0 %v502
  %v1366 = vpop.f32.mrb[0].mxu0
  %v1367 = vadd.f32 %v1270, %v1366
  %v1368 = vpop.f32.mrb[0].mxu0
  %v1369 = vpop.f32.mrb[0].mxu0
  %v1370 = vadd.f32 %v1273, %v1369
  %v1371 = vpop.f32.mrb[0].mxu0
  %1372 = vmatprep.mubr.bf16.mxu0 %v513
  %1373 = vmatmul.mubr.bf16.gmra.mrb[0].mxu0 %v512
  %v1374 = vpop.f32.mrb[0].mxu0
  %v1375 = vadd.f32 %v1278, %v1374
  %v1376 = vpop.f32.mrb[0].mxu0
  %v1377 = vpop.f32.mrb[0].mxu0
  %v1378 = vadd.f32 %v1281, %v1377
  %v1379 = vpop.f32.mrb[0].mxu0
  %1380 = vmatprep.mubr.bf16.mxu0 %v523
  %1381 = vmatmul.mubr.bf16.gmra.mrb[0].mxu0 %v522
  %v1382 = vpop.f32.mrb[0].mxu0
  %v1383 = vadd.f32 %v1286, %v1382
  %v1384 = vpop.f32.mrb[0].mxu0
  %v1385 = vpop.f32.mrb[0].mxu0
  %v1386 = vadd.f32 %v1289, %v1385
  %v1387 = vpop.f32.mrb[0].mxu0
  %1388 = vmatprep.mubr.bf16.mxu0 %v533
  %1389 = vmatmul.mubr.bf16.gmra.mrb[0].mxu0 %v532
  %v1390 = vpop.f32.mrb[0].mxu0
  %v1391 = vadd.f32 %v1294, %v1390
  %v1392 = vpop.f32.mrb[0].mxu0
  %v1393 = vpop.f32.mrb[0].mxu0
  %v1394 = vadd.f32 %v1297, %v1393
  %v1395 = vpop.f32.mrb[0].mxu0
  %1396 = vmatprep.mubr.bf16.mxu0 %v543
  %1397 = vmatmul.mubr.bf16.gmra.mrb[0].mxu0 %v542
  %v1398 = vpop.f32.mrb[0].mxu0
  %v1399 = vadd.f32 %v1302, %v1398
  %v1400 = vpop.f32.mrb[0].mxu0
  %v1401 = vpop.f32.mrb[0].mxu0
  %v1402 = vadd.f32 %v1305, %v1401
  %v1403 = vpop.f32.mrb[0].mxu0
  %1404 = vmatprep.mubr.bf16.mxu0 %v553
  %1405 = vmatmul.mubr.bf16.gmra.mrb[0].mxu0 %v552
  %v1406 = vpop.f32.mrb[0].mxu0
  %v1407 = vadd.f32 %v1310, %v1406
  %v1408 = vpop.f32.mrb[0].mxu0
  %v1409 = vpop.f32.mrb[0].mxu0
  %v1410 = vadd.f32 %v1313, %v1409
  %v1411 = vpop.f32.mrb[0].mxu0
  %1412 = vmatprep.mubr.bf16.mxu0 %v563
  %1413 = vmatmul.mubr.bf16.gmra.mrb[0].mxu0 %v562
  %v1414 = vpop.f32.mrb[0].mxu0
  %v1415 = vadd.f32 %v1318, %v1414
  %v1416 = vpop.f32.mrb[0].mxu0
  %v1417 = vpop.f32.mrb[0].mxu0
  %v1418 = vadd.f32 %v1321, %v1417
  %v1419 = vpop.f32.mrb[0].mxu0
  %1420 = vmatprep.mubr.bf16.mxu0 %v573
  %1421 = vmatmul.mubr.bf16.gmra.mrb[0].mxu0 %v572
  %v1422 = vpop.f32.mrb[0].mxu0
  %v1423 = vadd.f32 %v1326, %v1422
  %v1424 = vpop.f32.mrb[0].mxu0
  %v1425 = vpop.f32.mrb[0].mxu0
  %v1426 = vadd.f32 %v1329, %v1425
  %v1427 = vpop.f32.mrb[0].mxu0
  %1428 = vdwg.mxu0
  %1429 = vmatprep.subr.bf16.mxu0 0
  %1430 = vmatpush1.bf16.msra.mxu0 %v1026
  %1431 = vmatprep.subr.bf16.mxu0 0
  %1432 = vmatpush1.bf16.msra.mxu0 %v1027
  %1433 = vmatprep.subr.bf16.mxu0 0
  %1434 = vmatpush1.bf16.msra.mxu0 %v1028
  %1435 = vmatprep.subr.bf16.mxu0 0
  %1436 = vmatpush1.bf16.msra.mxu0 %v1029
  %1437 = vmatprep.subr.bf16.mxu0 0
  %1438 = vmatpush1.bf16.msra.mxu0 %v1030
  %1439 = vmatprep.subr.bf16.mxu0 0
  %1440 = vmatpush1.bf16.msra.mxu0 %v1031
  %1441 = vmatprep.subr.bf16.mxu0 0
  %1442 = vmatpush1.bf16.msra.mxu0 %v1032
  %1443 = vmatprep.subr.bf16.mxu0 0
  %1444 = vmatpush1.bf16.msra.mxu0 %v1033
  %1445 = vmatprep.subr.bf16.mxu0 0
  %1446 = vmatpush1.bf16.msra.mxu0 %v1034
  %1447 = vmatprep.subr.bf16.mxu0 0
  %1448 = vmatpush1.bf16.msra.mxu0 %v1035
  %1449 = vmatprep.subr.bf16.mxu0 0
  %1450 = vmatpush1.bf16.msra.mxu0 %v1036
  %1451 = vmatprep.subr.bf16.mxu0 0
  %1452 = vmatpush1.bf16.msra.mxu0 %v1037
  %1453 = vmatprep.subr.bf16.mxu0 0
  %1454 = vmatpush1.bf16.msra.mxu0 %v1038
  %1455 = vmatprep.subr.bf16.mxu0 0
  %1456 = vmatpush1.bf16.msra.mxu0 %v1039
  %1457 = vmatprep.subr.bf16.mxu0 0
  %1458 = vmatpush1.bf16.msra.mxu0 %v1040
  %1459 = vmatprep.subr.bf16.mxu0 0
  %1460 = vmatpush1.bf16.msra.mxu0 %v1041
  %1461 = vmatprep.mubr.bf16.mxu0 %v505
  %1462 = vmatmul.mubr.bf16.gmra.mrb[0].mxu0 %v504
  %v1463 = vpop.f32.mrb[0].mxu0
  %v1464 = vadd.f32 %v1367, %v1463
  %v1465 = vpop.f32.mrb[0].mxu0
  %v1466 = vpop.f32.mrb[0].mxu0
  %v1467 = vadd.f32 %v1370, %v1466
  %v1468 = vpop.f32.mrb[0].mxu0
  %1469 = vmatprep.mubr.bf16.mxu0 %v515
  %1470 = vmatmul.mubr.bf16.gmra.mrb[0].mxu0 %v514
  %v1471 = vpop.f32.mrb[0].mxu0
  %v1472 = vadd.f32 %v1375, %v1471
  %v1473 = vpop.f32.mrb[0].mxu0
  %v1474 = vpop.f32.mrb[0].mxu0
  %v1475 = vadd.f32 %v1378, %v1474
  %v1476 = vpop.f32.mrb[0].mxu0
  %1477 = vmatprep.mubr.bf16.mxu0 %v525
  %1478 = vmatmul.mubr.bf16.gmra.mrb[0].mxu0 %v524
  %v1479 = vpop.f32.mrb[0].mxu0
  %v1480 = vadd.f32 %v1383, %v1479
  %v1481 = vpop.f32.mrb[0].mxu0
  %v1482 = vpop.f32.mrb[0].mxu0
  %v1483 = vadd.f32 %v1386, %v1482
  %v1484 = vpop.f32.mrb[0].mxu0
  %1485 = vmatprep.mubr.bf16.mxu0 %v535
  %1486 = vmatmul.mubr.bf16.gmra.mrb[0].mxu0 %v534
  %v1487 = vpop.f32.mrb[0].mxu0
  %v1488 = vadd.f32 %v1391, %v1487
  %v1489 = vpop.f32.mrb[0].mxu0
  %v1490 = vpop.f32.mrb[0].mxu0
  %v1491 = vadd.f32 %v1394, %v1490
  %v1492 = vpop.f32.mrb[0].mxu0
  %1493 = vmatprep.mubr.bf16.mxu0 %v545
  %1494 = vmatmul.mubr.bf16.gmra.mrb[0].mxu0 %v544
  %v1495 = vpop.f32.mrb[0].mxu0
  %v1496 = vadd.f32 %v1399, %v1495
  %v1497 = vpop.f32.mrb[0].mxu0
  %v1498 = vpop.f32.mrb[0].mxu0
  %v1499 = vadd.f32 %v1402, %v1498
  %v1500 = vpop.f32.mrb[0].mxu0
  %1501 = vmatprep.mubr.bf16.mxu0 %v555
  %1502 = vmatmul.mubr.bf16.gmra.mrb[0].mxu0 %v554
  %v1503 = vpop.f32.mrb[0].mxu0
  %v1504 = vadd.f32 %v1407, %v1503
  %v1505 = vpop.f32.mrb[0].mxu0
  %v1506 = vpop.f32.mrb[0].mxu0
  %v1507 = vadd.f32 %v1410, %v1506
  %v1508 = vpop.f32.mrb[0].mxu0
  %1509 = vmatprep.mubr.bf16.mxu0 %v565
  %1510 = vmatmul.mubr.bf16.gmra.mrb[0].mxu0 %v564
  %v1511 = vpop.f32.mrb[0].mxu0
  %v1512 = vadd.f32 %v1415, %v1511
  %v1513 = vpop.f32.mrb[0].mxu0
  %v1514 = vpop.f32.mrb[0].mxu0
  %v1515 = vadd.f32 %v1418, %v1514
  %v1516 = vpop.f32.mrb[0].mxu0
  %1517 = vmatprep.mubr.bf16.mxu0 %v575
  %1518 = vmatmul.mubr.bf16.gmra.mrb[0].mxu0 %v574
  %v1519 = vpop.f32.mrb[0].mxu0
  %v1520 = vadd.f32 %v1423, %v1519
  %v1521 = vpop.f32.mrb[0].mxu0
  %v1522 = vpop.f32.mrb[0].mxu0
  %v1523 = vadd.f32 %v1426, %v1522
  %v1524 = vpop.f32.mrb[0].mxu0
  %1525 = vdwg.mxu0
  %1526 = vmatprep.subr.bf16.mxu0 0
  %1527 = vmatpush1.bf16.msra.mxu0 %v1042
  %1528 = vmatprep.subr.bf16.mxu0 0
  %1529 = vmatpush1.bf16.msra.mxu0 %v1043
  %1530 = vmatprep.subr.bf16.mxu0 0
  %1531 = vmatpush1.bf16.msra.mxu0 %v1044
  %1532 = vmatprep.subr.bf16.mxu0 0
  %1533 = vmatpush1.bf16.msra.mxu0 %v1045
  %1534 = vmatprep.subr.bf16.mxu0 0
  %1535 = vmatpush1.bf16.msra.mxu0 %v1046
  %1536 = vmatprep.subr.bf16.mxu0 0
  %1537 = vmatpush1.bf16.msra.mxu0 %v1047
  %1538 = vmatprep.subr.bf16.mxu0 0
  %1539 = vmatpush1.bf16.msra.mxu0 %v1048
  %1540 = vmatprep.subr.bf16.mxu0 0
  %1541 = vmatpush1.bf16.msra.mxu0 %v1049
  %1542 = vmatprep.subr.bf16.mxu0 0
  %1543 = vmatpush1.bf16.msra.mxu0 %v1050
  %1544 = vmatprep.subr.bf16.mxu0 0
  %1545 = vmatpush1.bf16.msra.mxu0 %v1051
  %1546 = vmatprep.subr.bf16.mxu0 0
  %1547 = vmatpush1.bf16.msra.mxu0 %v1052
  %1548 = vmatprep.subr.bf16.mxu0 0
  %1549 = vmatpush1.bf16.msra.mxu0 %v1053
  %1550 = vmatprep.subr.bf16.mxu0 0
  %1551 = vmatpush1.bf16.msra.mxu0 %v1054
  %1552 = vmatprep.subr.bf16.mxu0 0
  %1553 = vmatpush1.bf16.msra.mxu0 %v1055
  %1554 = vmatprep.subr.bf16.mxu0 0
  %1555 = vmatpush1.bf16.msra.mxu0 %v1056
  %1556 = vmatprep.subr.bf16.mxu0 0
  %1557 = vmatpush1.bf16.msra.mxu0 %v1057
  %1558 = vmatprep.mubr.bf16.mxu0 %v507
  %1559 = vmatmul.mubr.bf16.gmra.mrb[0].mxu0 %v506
  %v1560 = vpop.f32.mrb[0].mxu0
  %v1561 = vadd.f32 %v1464, %v1560
  %v1562 = vpop.f32.mrb[0].mxu0
  %v1563 = vpop.f32.mrb[0].mxu0
  %v1564 = vadd.f32 %v1467, %v1563
  %v1565 = vpop.f32.mrb[0].mxu0
  %1566 = vmatprep.mubr.bf16.mxu0 %v517
  %1567 = vmatmul.mubr.bf16.gmra.mrb[0].mxu0 %v516
  %v1568 = vpop.f32.mrb[0].mxu0
  %v1569 = vadd.f32 %v1472, %v1568
  %v1570 = vpop.f32.mrb[0].mxu0
  %v1571 = vpop.f32.mrb[0].mxu0
  %v1572 = vadd.f32 %v1475, %v1571
  %v1573 = vpop.f32.mrb[0].mxu0
  %1574 = vmatprep.mubr.bf16.mxu0 %v527
  %1575 = vmatmul.mubr.bf16.gmra.mrb[0].mxu0 %v526
  %v1576 = vpop.f32.mrb[0].mxu0
  %v1577 = vadd.f32 %v1480, %v1576
  %v1578 = vpop.f32.mrb[0].mxu0
  %v1579 = vpop.f32.mrb[0].mxu0
  %v1580 = vadd.f32 %v1483, %v1579
  %v1581 = vpop.f32.mrb[0].mxu0
  %1582 = vmatprep.mubr.bf16.mxu0 %v537
  %1583 = vmatmul.mubr.bf16.gmra.mrb[0].mxu0 %v536
  %v1584 = vpop.f32.mrb[0].mxu0
  %v1585 = vadd.f32 %v1488, %v1584
  %v1586 = vpop.f32.mrb[0].mxu0
  %v1587 = vpop.f32.mrb[0].mxu0
  %v1588 = vadd.f32 %v1491, %v1587
  %v1589 = vpop.f32.mrb[0].mxu0
  %1590 = vmatprep.mubr.bf16.mxu0 %v547
  %1591 = vmatmul.mubr.bf16.gmra.mrb[0].mxu0 %v546
  %v1592 = vpop.f32.mrb[0].mxu0
  %v1593 = vadd.f32 %v1496, %v1592
  %v1594 = vpop.f32.mrb[0].mxu0
  %v1595 = vpop.f32.mrb[0].mxu0
  %v1596 = vadd.f32 %v1499, %v1595
  %v1597 = vpop.f32.mrb[0].mxu0
  %1598 = vmatprep.mubr.bf16.mxu0 %v557
  %1599 = vmatmul.mubr.bf16.gmra.mrb[0].mxu0 %v556
  %v1600 = vpop.f32.mrb[0].mxu0
  %v1601 = vadd.f32 %v1504, %v1600
  %v1602 = vpop.f32.mrb[0].mxu0
  %v1603 = vpop.f32.mrb[0].mxu0
  %v1604 = vadd.f32 %v1507, %v1603
  %v1605 = vpop.f32.mrb[0].mxu0
  %1606 = vmatprep.mubr.bf16.mxu0 %v567
  %1607 = vmatmul.mubr.bf16.gmra.mrb[0].mxu0 %v566
  %v1608 = vpop.f32.mrb[0].mxu0
  %v1609 = vadd.f32 %v1512, %v1608
  %v1610 = vpop.f32.mrb[0].mxu0
  %v1611 = vpop.f32.mrb[0].mxu0
  %v1612 = vadd.f32 %v1515, %v1611
  %v1613 = vpop.f32.mrb[0].mxu0
  %1614 = vmatprep.mubr.bf16.mxu0 %v577
  %1615 = vmatmul.mubr.bf16.gmra.mrb[0].mxu0 %v576
  %v1616 = vpop.f32.mrb[0].mxu0
  %v1617 = vadd.f32 %v1520, %v1616
  %v1618 = vpop.f32.mrb[0].mxu0
  %v1619 = vpop.f32.mrb[0].mxu0
  %v1620 = vadd.f32 %v1523, %v1619
  %v1621 = vpop.f32.mrb[0].mxu0
  %1622 = vdwg.mxu0
  %vm1623 = vcmask 400384
  %v1624 = vsel %vm1623, %v1561, 0.0
  %1625 = vadd.xlane.f32.xlu0 %v1624
  %v1626 = vpop.xlane.xlu0 %1625
  %v1627 = vsel %vm1623, %v1564, 0.0
  %1628 = vadd.xlane.f32.xlu0 %v1627
  %v1629 = vpop.xlane.xlu0 %1628
  %v1630 = vsel %vm1623, %v1569, 0.0
  %1631 = vadd.xlane.f32.xlu0 %v1630
  %v1632 = vpop.xlane.xlu0 %1631
  %v1633 = vsel %vm1623, %v1572, 0.0
  %1634 = vadd.xlane.f32.xlu0 %v1633
  %v1635 = vpop.xlane.xlu0 %1634
  %v1636 = vsel %vm1623, %v1577, 0.0
  %1637 = vadd.xlane.f32.xlu0 %v1636
  %v1638 = vpop.xlane.xlu0 %1637
  %v1639 = vsel %vm1623, %v1580, 0.0
  %1640 = vadd.xlane.f32.xlu0 %v1639
  %v1641 = vpop.xlane.xlu0 %1640
  %v1642 = vsel %vm1623, %v1585, 0.0
  %1643 = vadd.xlane.f32.xlu0 %v1642
  %v1644 = vpop.xlane.xlu0 %1643
  %v1645 = vsel %vm1623, %v1588, 0.0
  %1646 = vadd.xlane.f32.xlu0 %v1645
  %v1647 = vpop.xlane.xlu0 %1646
  %v1648 = vsel %vm1623, %v1593, 0.0
  %1649 = vadd.xlane.f32.xlu0 %v1648
  %v1650 = vpop.xlane.xlu0 %1649
  %v1651 = vsel %vm1623, %v1596, 0.0
  %1652 = vadd.xlane.f32.xlu0 %v1651
  %v1653 = vpop.xlane.xlu0 %1652
  %v1654 = vsel %vm1623, %v1601, 0.0
  %1655 = vadd.xlane.f32.xlu0 %v1654
  %v1656 = vpop.xlane.xlu0 %1655
  %v1657 = vsel %vm1623, %v1604, 0.0
  %1658 = vadd.xlane.f32.xlu0 %v1657
  %v1659 = vpop.xlane.xlu0 %1658
  %v1660 = vsel %vm1623, %v1609, 0.0
  %1661 = vadd.xlane.f32.xlu0 %v1660
  %v1662 = vpop.xlane.xlu0 %1661
  %v1663 = vsel %vm1623, %v1612, 0.0
  %1664 = vadd.xlane.f32.xlu0 %v1663
  %v1665 = vpop.xlane.xlu0 %1664
  %v1666 = vsel %vm1623, %v1617, 0.0
  %1667 = vadd.xlane.f32.xlu0 %v1666
  %v1668 = vpop.xlane.xlu0 %1667
  %v1669 = vsel %vm1623, %v1620, 0.0
  %1670 = vadd.xlane.f32.xlu0 %v1669
  %v1671 = vpop.xlane.xlu0 %1670
  %v1672 = vrcp.pop 49.0
  %v1673 = vmul.f32 %v1626, %v1672
  %v1674 = vmul.f32 %v1629, %v1672
  %v1675 = vmul.f32 %v1632, %v1672
  %v1676 = vmul.f32 %v1635, %v1672
  %v1677 = vmul.f32 %v1638, %v1672
  %v1678 = vmul.f32 %v1641, %v1672
  %v1679 = vmul.f32 %v1644, %v1672
  %v1680 = vmul.f32 %v1647, %v1672
  %v1681 = vmul.f32 %v1650, %v1672
  %v1682 = vmul.f32 %v1653, %v1672
  %v1683 = vmul.f32 %v1656, %v1672
  %v1684 = vmul.f32 %v1659, %v1672
  %v1685 = vmul.f32 %v1662, %v1672
  %v1686 = vmul.f32 %v1665, %v1672
  %v1687 = vmul.f32 %v1668, %v1672
  %v1688 = vmul.f32 %v1671, %v1672
  %v1689 = vsub.f32 %v1561, %v1673
  %v1690 = vsub.f32 %v1564, %v1674
  %v1691 = vsub.f32 %v1569, %v1675
  %v1692 = vsub.f32 %v1572, %v1676
  %v1693 = vsub.f32 %v1577, %v1677
  %v1694 = vsub.f32 %v1580, %v1678
  %v1695 = vsub.f32 %v1585, %v1679
  %v1696 = vsub.f32 %v1588, %v1680
  %v1697 = vsub.f32 %v1593, %v1681
  %v1698 = vsub.f32 %v1596, %v1682
  %v1699 = vsub.f32 %v1601, %v1683
  %v1700 = vsub.f32 %v1604, %v1684
  %v1701 = vsub.f32 %v1609, %v1685
  %v1702 = vsub.f32 %v1612, %v1686
  %v1703 = vsub.f32 %v1617, %v1687
  %v1704 = vsub.f32 %v1620, %v1688
  %v1705 = vmul.f32 %v1689, %v1689
  %v1706 = vmul.f32 %v1690, %v1690
  %v1707 = vmul.f32 %v1691, %v1691
  %v1708 = vmul.f32 %v1692, %v1692
  %v1709 = vmul.f32 %v1693, %v1693
  %v1710 = vmul.f32 %v1694, %v1694
  %v1711 = vmul.f32 %v1695, %v1695
  %v1712 = vmul.f32 %v1696, %v1696
  %v1713 = vmul.f32 %v1697, %v1697
  %v1714 = vmul.f32 %v1698, %v1698
  %v1715 = vmul.f32 %v1699, %v1699
  %v1716 = vmul.f32 %v1700, %v1700
  %v1717 = vmul.f32 %v1701, %v1701
  %v1718 = vmul.f32 %v1702, %v1702
  %v1719 = vmul.f32 %v1703, %v1703
  %v1720 = vmul.f32 %v1704, %v1704
  %v1721 = vsel %vm1623, %v1705, 0.0
  %1722 = vadd.xlane.f32.xlu0 %v1721
  %v1723 = vpop.xlane.xlu0 %1722
  %v1724 = vsel %vm1623, %v1706, 0.0
  %1725 = vadd.xlane.f32.xlu0 %v1724
  %v1726 = vpop.xlane.xlu0 %1725
  %v1727 = vsel %vm1623, %v1707, 0.0
  %1728 = vadd.xlane.f32.xlu0 %v1727
  %v1729 = vpop.xlane.xlu0 %1728
  %v1730 = vsel %vm1623, %v1708, 0.0
  %1731 = vadd.xlane.f32.xlu0 %v1730
  %v1732 = vpop.xlane.xlu0 %1731
  %v1733 = vsel %vm1623, %v1709, 0.0
  %1734 = vadd.xlane.f32.xlu0 %v1733
  %v1735 = vpop.xlane.xlu0 %1734
  %v1736 = vsel %vm1623, %v1710, 0.0
  %1737 = vadd.xlane.f32.xlu0 %v1736
  %v1738 = vpop.xlane.xlu0 %1737
  %v1739 = vsel %vm1623, %v1711, 0.0
  %1740 = vadd.xlane.f32.xlu0 %v1739
  %v1741 = vpop.xlane.xlu0 %1740
  %v1742 = vsel %vm1623, %v1712, 0.0
  %1743 = vadd.xlane.f32.xlu0 %v1742
  %v1744 = vpop.xlane.xlu0 %1743
  %v1745 = vsel %vm1623, %v1713, 0.0
  %1746 = vadd.xlane.f32.xlu0 %v1745
  %v1747 = vpop.xlane.xlu0 %1746
  %v1748 = vsel %vm1623, %v1714, 0.0
  %1749 = vadd.xlane.f32.xlu0 %v1748
  %v1750 = vpop.xlane.xlu0 %1749
  %v1751 = vsel %vm1623, %v1715, 0.0
  %1752 = vadd.xlane.f32.xlu0 %v1751
  %v1753 = vpop.xlane.xlu0 %1752
  %v1754 = vsel %vm1623, %v1716, 0.0
  %1755 = vadd.xlane.f32.xlu0 %v1754
  %v1756 = vpop.xlane.xlu0 %1755
  %v1757 = vsel %vm1623, %v1717, 0.0
  %1758 = vadd.xlane.f32.xlu0 %v1757
  %v1759 = vpop.xlane.xlu0 %1758
  %v1760 = vsel %vm1623, %v1718, 0.0
  %1761 = vadd.xlane.f32.xlu0 %v1760
  %v1762 = vpop.xlane.xlu0 %1761
  %v1763 = vsel %vm1623, %v1719, 0.0
  %1764 = vadd.xlane.f32.xlu0 %v1763
  %v1765 = vpop.xlane.xlu0 %1764
  %v1766 = vsel %vm1623, %v1720, 0.0
  %1767 = vadd.xlane.f32.xlu0 %v1766
  %v1768 = vpop.xlane.xlu0 %1767
  %v1769 = vmul.f32 %v1723, %v1672
  %v1770 = vmul.f32 %v1726, %v1672
  %v1771 = vmul.f32 %v1729, %v1672
  %v1772 = vmul.f32 %v1732, %v1672
  %v1773 = vmul.f32 %v1735, %v1672
  %v1774 = vmul.f32 %v1738, %v1672
  %v1775 = vmul.f32 %v1741, %v1672
  %v1776 = vmul.f32 %v1744, %v1672
  %v1777 = vmul.f32 %v1747, %v1672
  %v1778 = vmul.f32 %v1750, %v1672
  %v1779 = vmul.f32 %v1753, %v1672
  %v1780 = vmul.f32 %v1756, %v1672
  %v1781 = vmul.f32 %v1759, %v1672
  %v1782 = vmul.f32 %v1762, %v1672
  %v1783 = vmul.f32 %v1765, %v1672
  %v1784 = vmul.f32 %v1768, %v1672
  %v1785 = vadd.f32 %v1769, 1e-05
  %v1786 = vadd.f32 %v1770, 1e-05
  %v1787 = vadd.f32 %v1771, 1e-05
  %v1788 = vadd.f32 %v1772, 1e-05
  %v1789 = vadd.f32 %v1773, 1e-05
  %v1790 = vadd.f32 %v1774, 1e-05
  %v1791 = vadd.f32 %v1775, 1e-05
  %v1792 = vadd.f32 %v1776, 1e-05
  %v1793 = vadd.f32 %v1777, 1e-05
  %v1794 = vadd.f32 %v1778, 1e-05
  %v1795 = vadd.f32 %v1779, 1e-05
  %v1796 = vadd.f32 %v1780, 1e-05
  %v1797 = vadd.f32 %v1781, 1e-05
  %v1798 = vadd.f32 %v1782, 1e-05
  %v1799 = vadd.f32 %v1783, 1e-05
  %v1800 = vadd.f32 %v1784, 1e-05
  %v1801 = vrsqrt.pop %v1785
  %v1802 = vrsqrt.pop %v1786
  %v1803 = vrsqrt.pop %v1787
  %v1804 = vrsqrt.pop %v1788
  %v1805 = vrsqrt.pop %v1789
  %v1806 = vrsqrt.pop %v1790
  %v1807 = vrsqrt.pop %v1791
  %v1808 = vrsqrt.pop %v1792
  %v1809 = vrsqrt.pop %v1793
  %v1810 = vrsqrt.pop %v1794
  %v1811 = vrsqrt.pop %v1795
  %v1812 = vrsqrt.pop %v1796
  %v1813 = vrsqrt.pop %v1797
  %v1814 = vrsqrt.pop %v1798
  %v1815 = vrsqrt.pop %v1799
  %v1816 = vrsqrt.pop %v1800
  %v1817 = vld [vmem:[%s2] sm:$0xff]
  %v1818 = vld [vmem:[%s2 + $0x8] sm:$0xff]
  %v1819 = vld [vmem:[%s2 + $0x10] sm:$0xff]
  %v1820 = vld [vmem:[%s2 + $0x18] sm:$0xff]
  %v1821 = vld [vmem:[%s2 + $0x20] sm:$0xff]
  %v1822 = vld [vmem:[%s2 + $0x28] sm:$0xff]
  %v1823 = vld [vmem:[%s2 + $0x30] sm:$0xff]
  %v1824 = vld [vmem:[%s2 + $0x38] sm:$0xff]
  %v1825 = vld [vmem:[%s2 + $0x40] sm:$0xff]
  %v1826 = vld [vmem:[%s2 + $0x48] sm:$0xff]
  %v1827 = vld [vmem:[%s2 + $0x50] sm:$0xff]
  %v1828 = vld [vmem:[%s2 + $0x58] sm:$0xff]
  %v1829 = vld [vmem:[%s2 + $0x60] sm:$0xff]
  %v1830 = vld [vmem:[%s2 + $0x68] sm:$0xff]
  %v1831 = vld [vmem:[%s2 + $0x70] sm:$0xff]
  %v1832 = vld [vmem:[%s2 + $0x78] sm:$0xff]
  %v1833 = vmul.f32 %v1817, %v1801
  %v1834 = vmul.f32 %v1818, %v1802
  %v1835 = vmul.f32 %v1819, %v1803
  %v1836 = vmul.f32 %v1820, %v1804
  %v1837 = vmul.f32 %v1821, %v1805
  %v1838 = vmul.f32 %v1822, %v1806
  %v1839 = vmul.f32 %v1823, %v1807
  %v1840 = vmul.f32 %v1824, %v1808
  %v1841 = vmul.f32 %v1825, %v1809
  %v1842 = vmul.f32 %v1826, %v1810
  %v1843 = vmul.f32 %v1827, %v1811
  %v1844 = vmul.f32 %v1828, %v1812
  %v1845 = vmul.f32 %v1829, %v1813
  %v1846 = vmul.f32 %v1830, %v1814
  %v1847 = vmul.f32 %v1831, %v1815
  %v1848 = vmul.f32 %v1832, %v1816
  %v1849 = vld [vmem:[%s3] sm:$0xff]
  %v1850 = vld [vmem:[%s3 + $0x8] sm:$0xff]
  %v1851 = vld [vmem:[%s3 + $0x10] sm:$0xff]
  %v1852 = vld [vmem:[%s3 + $0x18] sm:$0xff]
  %v1853 = vld [vmem:[%s3 + $0x20] sm:$0xff]
  %v1854 = vld [vmem:[%s3 + $0x28] sm:$0xff]
  %v1855 = vld [vmem:[%s3 + $0x30] sm:$0xff]
  %v1856 = vld [vmem:[%s3 + $0x38] sm:$0xff]
  %v1857 = vld [vmem:[%s3 + $0x40] sm:$0xff]
  %v1858 = vld [vmem:[%s3 + $0x48] sm:$0xff]
  %v1859 = vld [vmem:[%s3 + $0x50] sm:$0xff]
  %v1860 = vld [vmem:[%s3 + $0x58] sm:$0xff]
  %v1861 = vld [vmem:[%s3 + $0x60] sm:$0xff]
  %v1862 = vld [vmem:[%s3 + $0x68] sm:$0xff]
  %v1863 = vld [vmem:[%s3 + $0x70] sm:$0xff]
  %v1864 = vld [vmem:[%s3 + $0x78] sm:$0xff]
  %v1865 = vmul.f32 %v1673, %v1833
  %v1866 = vmul.f32 %v1674, %v1834
  %v1867 = vmul.f32 %v1675, %v1835
  %v1868 = vmul.f32 %v1676, %v1836
  %v1869 = vmul.f32 %v1677, %v1837
  %v1870 = vmul.f32 %v1678, %v1838
  %v1871 = vmul.f32 %v1679, %v1839
  %v1872 = vmul.f32 %v1680, %v1840
  %v1873 = vmul.f32 %v1681, %v1841
  %v1874 = vmul.f32 %v1682, %v1842
  %v1875 = vmul.f32 %v1683, %v1843
  %v1876 = vmul.f32 %v1684, %v1844
  %v1877 = vmul.f32 %v1685, %v1845
  %v1878 = vmul.f32 %v1686, %v1846
  %v1879 = vmul.f32 %v1687, %v1847
  %v1880 = vmul.f32 %v1688, %v1848
  %v1881 = vsub.f32 %v1849, %v1865
  %v1882 = vsub.f32 %v1850, %v1866
  %v1883 = vsub.f32 %v1851, %v1867
  %v1884 = vsub.f32 %v1852, %v1868
  %v1885 = vsub.f32 %v1853, %v1869
  %v1886 = vsub.f32 %v1854, %v1870
  %v1887 = vsub.f32 %v1855, %v1871
  %v1888 = vsub.f32 %v1856, %v1872
  %v1889 = vsub.f32 %v1857, %v1873
  %v1890 = vsub.f32 %v1858, %v1874
  %v1891 = vsub.f32 %v1859, %v1875
  %v1892 = vsub.f32 %v1860, %v1876
  %v1893 = vsub.f32 %v1861, %v1877
  %v1894 = vsub.f32 %v1862, %v1878
  %v1895 = vsub.f32 %v1863, %v1879
  %v1896 = vsub.f32 %v1864, %v1880
  %1898 = vset.pattern.permute.xlu0 0
  %1899 = vperm.xlu0 %1898, %v1833
  %v1900 = vpop.permute.xlu0 %1899
  %1903 = vset.pattern.permute.xlu0 0
  %1904 = vperm.xlu0 %1903, %v1834
  %v1905 = vpop.permute.xlu0 %1904
  %1908 = vset.pattern.permute.xlu0 0
  %1909 = vperm.xlu0 %1908, %v1835
  %v1910 = vpop.permute.xlu0 %1909
  %1913 = vset.pattern.permute.xlu0 0
  %1914 = vperm.xlu0 %1913, %v1836
  %v1915 = vpop.permute.xlu0 %1914
  %1918 = vset.pattern.permute.xlu0 0
  %1919 = vperm.xlu0 %1918, %v1837
  %v1920 = vpop.permute.xlu0 %1919
  %1923 = vset.pattern.permute.xlu0 0
  %1924 = vperm.xlu0 %1923, %v1838
  %v1925 = vpop.permute.xlu0 %1924
  %1928 = vset.pattern.permute.xlu0 0
  %1929 = vperm.xlu0 %1928, %v1839
  %v1930 = vpop.permute.xlu0 %1929
  %1933 = vset.pattern.permute.xlu0 0
  %1934 = vperm.xlu0 %1933, %v1840
  %v1935 = vpop.permute.xlu0 %1934
  %1938 = vset.pattern.permute.xlu0 0
  %1939 = vperm.xlu0 %1938, %v1841
  %v1940 = vpop.permute.xlu0 %1939
  %1943 = vset.pattern.permute.xlu0 0
  %1944 = vperm.xlu0 %1943, %v1842
  %v1945 = vpop.permute.xlu0 %1944
  %1948 = vset.pattern.permute.xlu0 0
  %1949 = vperm.xlu0 %1948, %v1843
  %v1950 = vpop.permute.xlu0 %1949
  %1953 = vset.pattern.permute.xlu0 0
  %1954 = vperm.xlu0 %1953, %v1844
  %v1955 = vpop.permute.xlu0 %1954
  %1958 = vset.pattern.permute.xlu0 0
  %1959 = vperm.xlu0 %1958, %v1845
  %v1960 = vpop.permute.xlu0 %1959
  %1963 = vset.pattern.permute.xlu0 0
  %1964 = vperm.xlu0 %1963, %v1846
  %v1965 = vpop.permute.xlu0 %1964
  %1968 = vset.pattern.permute.xlu0 0
  %1969 = vperm.xlu0 %1968, %v1847
  %v1970 = vpop.permute.xlu0 %1969
  %1973 = vset.pattern.permute.xlu0 0
  %1974 = vperm.xlu0 %1973, %v1848
  %v1975 = vpop.permute.xlu0 %1974
  %v1977 = vmul.f32 %v1561, %v1900
  %v1978 = vmul.f32 %v1564, %v1905
  %v1979 = vmul.f32 %v1569, %v1910
  %v1980 = vmul.f32 %v1572, %v1915
  %v1981 = vmul.f32 %v1577, %v1920
  %v1982 = vmul.f32 %v1580, %v1925
  %v1983 = vmul.f32 %v1585, %v1930
  %v1984 = vmul.f32 %v1588, %v1935
  %v1985 = vmul.f32 %v1593, %v1940
  %v1986 = vmul.f32 %v1596, %v1945
  %v1987 = vmul.f32 %v1601, %v1950
  %v1988 = vmul.f32 %v1604, %v1955
  %v1989 = vmul.f32 %v1609, %v1960
  %v1990 = vmul.f32 %v1612, %v1965
  %v1991 = vmul.f32 %v1617, %v1970
  %v1992 = vmul.f32 %v1620, %v1975
  %1994 = vset.pattern.permute.xlu0 0
  %1995 = vperm.xlu0 %1994, %v1881
  %v1996 = vpop.permute.xlu0 %1995
  %1999 = vset.pattern.permute.xlu0 0
  %2000 = vperm.xlu0 %1999, %v1882
  %v2001 = vpop.permute.xlu0 %2000
  %2004 = vset.pattern.permute.xlu0 0
  %2005 = vperm.xlu0 %2004, %v1883
  %v2006 = vpop.permute.xlu0 %2005
  %2009 = vset.pattern.permute.xlu0 0
  %2010 = vperm.xlu0 %2009, %v1884
  %v2011 = vpop.permute.xlu0 %2010
  %2014 = vset.pattern.permute.xlu0 0
  %2015 = vperm.xlu0 %2014, %v1885
  %v2016 = vpop.permute.xlu0 %2015
  %2019 = vset.pattern.permute.xlu0 0
  %2020 = vperm.xlu0 %2019, %v1886
  %v2021 = vpop.permute.xlu0 %2020
  %2024 = vset.pattern.permute.xlu0 0
  %2025 = vperm.xlu0 %2024, %v1887
  %v2026 = vpop.permute.xlu0 %2025
  %2029 = vset.pattern.permute.xlu0 0
  %2030 = vperm.xlu0 %2029, %v1888
  %v2031 = vpop.permute.xlu0 %2030
  %2034 = vset.pattern.permute.xlu0 0
  %2035 = vperm.xlu0 %2034, %v1889
  %v2036 = vpop.permute.xlu0 %2035
  %2039 = vset.pattern.permute.xlu0 0
  %2040 = vperm.xlu0 %2039, %v1890
  %v2041 = vpop.permute.xlu0 %2040
  %2044 = vset.pattern.permute.xlu0 0
  %2045 = vperm.xlu0 %2044, %v1891
  %v2046 = vpop.permute.xlu0 %2045
  %2049 = vset.pattern.permute.xlu0 0
  %2050 = vperm.xlu0 %2049, %v1892
  %v2051 = vpop.permute.xlu0 %2050
  %2054 = vset.pattern.permute.xlu0 0
  %2055 = vperm.xlu0 %2054, %v1893
  %v2056 = vpop.permute.xlu0 %2055
  %2059 = vset.pattern.permute.xlu0 0
  %2060 = vperm.xlu0 %2059, %v1894
  %v2061 = vpop.permute.xlu0 %2060
  %2064 = vset.pattern.permute.xlu0 0
  %2065 = vperm.xlu0 %2064, %v1895
  %v2066 = vpop.permute.xlu0 %2065
  %2069 = vset.pattern.permute.xlu0 0
  %2070 = vperm.xlu0 %2069, %v1896
  %v2071 = vpop.permute.xlu0 %2070
  %v2073 = vadd.f32 %v1977, %v1996
  %v2074 = vadd.f32 %v1978, %v2001
  %v2075 = vadd.f32 %v1979, %v2006
  %v2076 = vadd.f32 %v1980, %v2011
  %v2077 = vadd.f32 %v1981, %v2016
  %v2078 = vadd.f32 %v1982, %v2021
  %v2079 = vadd.f32 %v1983, %v2026
  %v2080 = vadd.f32 %v1984, %v2031
  %v2081 = vadd.f32 %v1985, %v2036
  %v2082 = vadd.f32 %v1986, %v2041
  %v2083 = vadd.f32 %v1987, %v2046
  %v2084 = vadd.f32 %v1988, %v2051
  %v2085 = vadd.f32 %v1989, %v2056
  %v2086 = vadd.f32 %v1990, %v2061
  %v2087 = vadd.f32 %v1991, %v2066
  %v2088 = vadd.f32 %v1992, %v2071
  %v2089 = vmax.f32 %v2073, 0.0
  %v2090 = vmax.f32 %v2074, 0.0
  %v2091 = vmax.f32 %v2075, 0.0
  %v2092 = vmax.f32 %v2076, 0.0
  %v2093 = vmax.f32 %v2077, 0.0
  %v2094 = vmax.f32 %v2078, 0.0
  %v2095 = vmax.f32 %v2079, 0.0
  %v2096 = vmax.f32 %v2080, 0.0
  %v2097 = vmax.f32 %v2081, 0.0
  %v2098 = vmax.f32 %v2082, 0.0
  %v2099 = vmax.f32 %v2083, 0.0
  %v2100 = vmax.f32 %v2084, 0.0
  %v2101 = vmax.f32 %v2085, 0.0
  %v2102 = vmax.f32 %v2086, 0.0
  %v2103 = vmax.f32 %v2087, 0.0
  %v2104 = vmax.f32 %v2088, 0.0
  %2105 = vst.msk [vmem:[%s4] sm:$0xff] %vm1623, %v2089
  %2106 = vst.msk [vmem:[%s4 + $0x8] sm:$0xff] %vm1623, %v2090
  %2107 = vst.msk [vmem:[%s4 + $0x10] sm:$0xff] %vm1623, %v2091
  %2108 = vst.msk [vmem:[%s4 + $0x18] sm:$0xff] %vm1623, %v2092
  %2109 = vst.msk [vmem:[%s4 + $0x20] sm:$0xff] %vm1623, %v2093
  %2110 = vst.msk [vmem:[%s4 + $0x28] sm:$0xff] %vm1623, %v2094
  %2111 = vst.msk [vmem:[%s4 + $0x30] sm:$0xff] %vm1623, %v2095
  %2112 = vst.msk [vmem:[%s4 + $0x38] sm:$0xff] %vm1623, %v2096
  %2113 = vst.msk [vmem:[%s4 + $0x40] sm:$0xff] %vm1623, %v2097
  %2114 = vst.msk [vmem:[%s4 + $0x48] sm:$0xff] %vm1623, %v2098
  %2115 = vst.msk [vmem:[%s4 + $0x50] sm:$0xff] %vm1623, %v2099
  %2116 = vst.msk [vmem:[%s4 + $0x58] sm:$0xff] %vm1623, %v2100
  %2117 = vst.msk [vmem:[%s4 + $0x60] sm:$0xff] %vm1623, %v2101
  %2118 = vst.msk [vmem:[%s4 + $0x68] sm:$0xff] %vm1623, %v2102
  %2119 = vst.msk [vmem:[%s4 + $0x70] sm:$0xff] %vm1623, %v2103
  %2120 = vst.msk [vmem:[%s4 + $0x78] sm:$0xff] %vm1623, %v2104
  // Predicated region
  $region18: #{tpu_custom_call.1} parent=0 // pred_check
    _
  $region19: #{tpu_custom_call.1} parent=0 // pred_check_branch
    %2122 = sbr.rel (0) target = $region21
  $region20: #{tpu_custom_call.1} parent=0 // pred_region
    _
  $region21: #{tpu_custom_call.1} parent=0 // pred_fallthru
    _
  // Predicated region
  $region22: #{tpu_custom_call.1} parent=0 // pred_check
    _
  $region23: #{tpu_custom_call.1} parent=0 // pred_check_branch
    %2124 = sbr.rel (0) target = $region25
  $region24: #{tpu_custom_call.1} parent=0 // pred_region
    _
  $region25: #{tpu_custom_call.1} parent=0 // pred_fallthru
    _

</llo_original>
